<compile_context>
chip_gen: v7x
topology: tpu7x:2x2x1
jax: 0.10.0
libtpu: 0.0.40
codegen_flags: <defaults>
</compile_context>

<pallas_src>
import jax
import jax.numpy as jnp
from jax.experimental import pallas as pl
from jax.experimental.pallas import tpu as pltpu


def _round_up(n, m):
    return (n + m - 1) // m * m


def _default_min_grid_steps():
    """>=2 parallel grid steps on v7x (2 TensorCores/chip), 1 elsewhere."""
    try:
        kind = jax.devices()[0].device_kind.lower()
    except Exception:
        return 1
    return 2 if "v7" in kind else 1


# -----------------------------------------------------------------------------
# Kernel: 5 matmuls (encode 2, fused bottleneck 1, decode 2), biases + ReLU f32.
# -----------------------------------------------------------------------------
def autoencoder_kernel(x_ref,
                       w1_ref, w2_ref, w34_ref, w5_ref, w6_ref,
                       b1_ref, b2_ref, b34_ref, b5_ref, b6_ref,
                       out_ref):
    cd = w1_ref.dtype  # MXU compute dtype (bf16 by default), f32 accumulation

    x = x_ref[...].astype(cd)

    # ---- encode ----  (Dropout is identity in eval mode)
    h = jnp.dot(x, w1_ref[...], preferred_element_type=jnp.float32)
    h = jnp.maximum(h + b1_ref[...], 0.0)
    h = jnp.dot(h.astype(cd), w2_ref[...], preferred_element_type=jnp.float32)
    h = jnp.maximum(h + b2_ref[...], 0.0)

    # ---- fused: Linear(64,enc) -> BatchNorm1d(enc) -> Linear(enc,64) ----
    h = jnp.dot(h.astype(cd), w34_ref[...], preferred_element_type=jnp.float32)
    h = jnp.maximum(h + b34_ref[...], 0.0)

    # ---- decode tail ----
    h = jnp.dot(h.astype(cd), w5_ref[...], preferred_element_type=jnp.float32)
    h = jnp.maximum(h + b5_ref[...], 0.0)
    y = jnp.dot(h.astype(cd), w6_ref[...], preferred_element_type=jnp.float32)
    out_ref[...] = (y + b6_ref[...]).astype(out_ref.dtype)


# -----------------------------------------------------------------------------
# Parameter preparation: fuse w3 / BN / w4 exactly (eval mode), cast to bf16.
# -----------------------------------------------------------------------------
def pack_params(raw, *, weight_dtype=jnp.bfloat16, bn_eps=1e-5):
    # BatchNorm1d eval:  bn(z) = z*scale + shift
    scale = raw["bn_gamma"] / jnp.sqrt(raw["bn_var"] + bn_eps)   # (1, enc)
    shift = raw["bn_beta"] - raw["bn_mean"] * scale              # (1, enc)

    w4s = scale.reshape(-1, 1) * raw["w4"]                       # (enc, 64)
    w34 = raw["w3"] @ w4s                                        # (64, 64)
    b34 = raw["b3"] @ w4s + shift @ raw["w4"] + raw["b4"]        # (1, 64)

    wd = weight_dtype
    return dict(
        w1=raw["w1"].astype(wd), w2=raw["w2"].astype(wd), w34=w34.astype(wd),
        w5=raw["w5"].astype(wd), w6=raw["w6"].astype(wd),
        b1=raw["b1"].astype(jnp.float32), b2=raw["b2"].astype(jnp.float32),
        b34=b34.astype(jnp.float32), b5=raw["b5"].astype(jnp.float32),
        b6=raw["b6"].astype(jnp.float32),
    )


# -----------------------------------------------------------------------------
# Wrapper
# -----------------------------------------------------------------------------
def autoencoder_forward(x, packed, *, batch_tile=1024, min_grid_steps=None):
    """x: [B, in_shape] float32.  packed: output of pack_params()."""
    B, in_shape = x.shape
    assert packed["w1"].shape[0] == in_shape
    if min_grid_steps is None:
        min_grid_steps = _default_min_grid_steps()

    if B <= batch_tile and min_grid_steps <= 1:
        # Single full-batch tile: no batch padding, no output slicing.
        bt, B_p = B, B
    else:
        steps = max(min_grid_steps, pl.cdiv(B, batch_tile))
        bt = max(8, _round_up(pl.cdiv(B, steps), 8))
        B_p = _round_up(B, bt)

    x_in = x if B_p == B else jnp.zeros((B_p, in_shape), x.dtype).at[:B].set(x)

    weights = (packed["w1"], packed["w2"], packed["w34"], packed["w5"], packed["w6"])
    biases = (packed["b1"], packed["b2"], packed["b34"], packed["b5"], packed["b6"])

    x_spec = pl.BlockSpec((bt, in_shape), lambda i: (i, 0))
    out_spec = pl.BlockSpec((bt, in_shape), lambda i: (i, 0))
    # Small operands fully resident at every grid step (constant index map).
    const_specs = [pl.BlockSpec(a.shape, lambda *_: (0, 0)) for a in weights + biases]

    y_p = pl.pallas_call(
        autoencoder_kernel,
        out_shape=jax.ShapeDtypeStruct((B_p, in_shape), x.dtype),
        grid_spec=pltpu.PrefetchScalarGridSpec(
            num_scalar_prefetch=0,
            grid=(B_p // bt,),
            in_specs=[x_spec] + const_specs,
            out_specs=out_spec,
        ),
        compiler_params=pltpu.CompilerParams(
            dimension_semantics=("parallel",),
            vmem_limit_bytes=32 * 1024 * 1024,  # v5e default scoped VMEM is 16 MiB
        ),
    )(x_in, *weights, *biases)

    return y_p if B_p == B else y_p[:B]


# -----------------------------------------------------------------------------
# Init + pure-JAX reference (unfused, f32) for correctness checking
# -----------------------------------------------------------------------------
def init_params(key, in_shape, enc_shape):
    """PyTorch-style init. Linear weights stored transposed [in, out]."""
    def linear(k, fan_in, fan_out):
        kw, kb = jax.random.split(k)
        bound = 1.0 / jnp.sqrt(fan_in)
        w = jax.random.uniform(kw, (fan_in, fan_out), jnp.float32, -bound, bound)
        b = jax.random.uniform(kb, (1, fan_out), jnp.float32, -bound, bound)
        return w, b

    keys = jax.random.split(key, 8)
    w1, b1 = linear(keys[0], in_shape, 128)
    w2, b2 = linear(keys[1], 128, 64)
    w3, b3 = linear(keys[2], 64, enc_shape)
    w4, b4 = linear(keys[3], enc_shape, 64)
    w5, b5 = linear(keys[4], 64, 128)
    w6, b6 = linear(keys[5], 128, in_shape)

    # BatchNorm1d(enc_shape) eval-mode params; non-trivial running stats so the
    # BN/bottleneck fusion path is actually exercised.
    bn_gamma = 1.0 + 0.1 * jax.random.normal(keys[6], (1, enc_shape), jnp.float32)
    bn_beta = 0.1 * jax.random.normal(keys[7], (1, enc_shape), jnp.float32)
    bn_mean = 0.05 * jnp.ones((1, enc_shape), jnp.float32)
    bn_var = jnp.ones((1, enc_shape), jnp.float32) * 1.2

    return dict(w1=w1, b1=b1, w2=w2, b2=b2, w3=w3, b3=b3,
                w4=w4, b4=b4, w5=w5, b5=b5, w6=w6, b6=b6,
                bn_gamma=bn_gamma, bn_beta=bn_beta,
                bn_mean=bn_mean, bn_var=bn_var)


def reference_forward(x, p):
    h = jnp.maximum(x @ p["w1"] + p["b1"], 0.0)
    h = jnp.maximum(h @ p["w2"] + p["b2"], 0.0)
    z = h @ p["w3"] + p["b3"]
    scale = p["bn_gamma"] / jnp.sqrt(p["bn_var"] + 1e-5)
    z = (z - p["bn_mean"]) * scale + p["bn_beta"]
    h = jnp.maximum(z @ p["w4"] + p["b4"], 0.0)
    h = jnp.maximum(h @ p["w5"] + p["b5"], 0.0)
    return h @ p["w6"] + p["b6"]


if __name__ == "__main__":
    # Small demo shapes: B=512 so v7x still gets 2 parallel grid steps,
    # single-TC chips run one 512-row tile.
    B, IN_SHAPE, ENC_SHAPE = 512, 32, 8

    key = jax.random.PRNGKey(0)
    kx, kp = jax.random.split(key)
    x = jax.random.normal(kx, (B, IN_SHAPE), jnp.float32)
    raw = init_params(kp, IN_SHAPE, ENC_SHAPE)
    packed = pack_params(raw)  # bf16 weights, fused bottleneck

    y = autoencoder_forward(x, packed)
    y = jax.block_until_ready(y)

    y_ref = reference_forward(x, raw)  # exact f32, unfused
    assert y.shape == (B, IN_SHAPE)
    # bf16 weights/activations (f32 accumulation) -> loosened tolerance.
    max_err = float(jnp.max(jnp.abs(y - y_ref)))
    assert jnp.allclose(y, y_ref, atol=5e-2, rtol=5e-2), max_err

    print("KERNEL_OK")
</pallas_src>

<mosaic_0001>
module attributes {stable_mosaic.version = 11 : i64} {
  func.func @autoencoder_kernel(%arg0: i32, %arg1: memref<512x32xf32, #tpu.memory_space<vmem>>, %arg2: memref<32x128xbf16, #tpu.memory_space<vmem>>, %arg3: memref<128x64xbf16, #tpu.memory_space<vmem>>, %arg4: memref<64x64xbf16, #tpu.memory_space<vmem>>, %arg5: memref<64x128xbf16, #tpu.memory_space<vmem>>, %arg6: memref<128x32xbf16, #tpu.memory_space<vmem>>, %arg7: memref<1x128xf32, #tpu.memory_space<vmem>>, %arg8: memref<1x64xf32, #tpu.memory_space<vmem>>, %arg9: memref<1x64xf32, #tpu.memory_space<vmem>>, %arg10: memref<1x128xf32, #tpu.memory_space<vmem>>, %arg11: memref<1x32xf32, #tpu.memory_space<vmem>>, %arg12: memref<512x32xf32, #tpu.memory_space<vmem>>) attributes {dimension_semantics = [#tpu.dimension_semantics<parallel>], iteration_bounds = array<i64: 1>, scalar_prefetch = 0 : i64, scratch_operands = 0 : i64, tpu.core_type = #tpu.core_type<tc>, window_params = [{transform_indices = @transform_0, window_bounds = array<i64: 512, 32>}, {pipeline_mode = #tpu.pipeline_mode<synchronous>, transform_indices = @transform_1, window_bounds = array<i64: 32, 128>}, {pipeline_mode = #tpu.pipeline_mode<synchronous>, transform_indices = @transform_2, window_bounds = array<i64: 128, 64>}, {pipeline_mode = #tpu.pipeline_mode<synchronous>, transform_indices = @transform_3, window_bounds = array<i64: 64, 64>}, {pipeline_mode = #tpu.pipeline_mode<synchronous>, transform_indices = @transform_4, window_bounds = array<i64: 64, 128>}, {pipeline_mode = #tpu.pipeline_mode<synchronous>, transform_indices = @transform_5, window_bounds = array<i64: 128, 32>}, {pipeline_mode = #tpu.pipeline_mode<synchronous>, transform_indices = @transform_6, window_bounds = array<i64: 1, 128>}, {pipeline_mode = #tpu.pipeline_mode<synchronous>, transform_indices = @transform_7, window_bounds = array<i64: 1, 64>}, {pipeline_mode = #tpu.pipeline_mode<synchronous>, transform_indices = @transform_8, window_bounds = array<i64: 1, 64>}, {pipeline_mode = #tpu.pipeline_mode<synchronous>, transform_indices = @transform_9, window_bounds = array<i64: 1, 128>}, {pipeline_mode = #tpu.pipeline_mode<synchronous>, transform_indices = @transform_10, window_bounds = array<i64: 1, 32>}, {transform_indices = @transform_11, window_bounds = array<i64: 512, 32>}]} {
    %c0 = arith.constant 0 : index
    %c0_0 = arith.constant 0 : index
    %0 = vector.load %arg1[%c0, %c0_0] : memref<512x32xf32, #tpu.memory_space<vmem>>, vector<512x32xf32>
    %1 = arith.truncf %0 : vector<512x32xf32> to vector<512x32xbf16>
    %c0_1 = arith.constant 0 : index
    %c0_2 = arith.constant 0 : index
    %2 = vector.load %arg2[%c0_1, %c0_2] : memref<32x128xbf16, #tpu.memory_space<vmem>>, vector<32x128xbf16>
    %cst = arith.constant dense<0.000000e+00> : vector<512x128xf32>
    %3 = tpu.matmul %1, %2, %cst {dimension_numbers = #tpu.dot_dimension_numbers<[1], [0], [0], [1], [0, 0, 1, 1], [], []>} : vector<512x32xbf16>, vector<32x128xbf16>, vector<512x128xf32> -> vector<512x128xf32>
    %c0_3 = arith.constant 0 : index
    %c0_4 = arith.constant 0 : index
    %4 = vector.load %arg7[%c0_3, %c0_4] : memref<1x128xf32, #tpu.memory_space<vmem>>, vector<1x128xf32>
    %5 = vector.broadcast %4 : vector<1x128xf32> to vector<512x128xf32>
    %6 = arith.addf %3, %5 : vector<512x128xf32>
    %cst_5 = arith.constant 0.000000e+00 : f32
    %7 = vector.broadcast %cst_5 : f32 to vector<512x128xf32>
    %8 = arith.maximumf %6, %7 : vector<512x128xf32>
    %9 = arith.truncf %8 : vector<512x128xf32> to vector<512x128xbf16>
    %c0_6 = arith.constant 0 : index
    %c0_7 = arith.constant 0 : index
    %10 = vector.load %arg3[%c0_6, %c0_7] : memref<128x64xbf16, #tpu.memory_space<vmem>>, vector<128x64xbf16>
    %cst_8 = arith.constant dense<0.000000e+00> : vector<512x64xf32>
    %11 = tpu.matmul %9, %10, %cst_8 {dimension_numbers = #tpu.dot_dimension_numbers<[1], [0], [0], [1], [0, 0, 1, 1], [], []>} : vector<512x128xbf16>, vector<128x64xbf16>, vector<512x64xf32> -> vector<512x64xf32>
    %c0_9 = arith.constant 0 : index
    %c0_10 = arith.constant 0 : index
    %12 = vector.load %arg8[%c0_9, %c0_10] : memref<1x64xf32, #tpu.memory_space<vmem>>, vector<1x64xf32>
    %13 = vector.broadcast %12 : vector<1x64xf32> to vector<512x64xf32>
    %14 = arith.addf %11, %13 : vector<512x64xf32>
    %cst_11 = arith.constant 0.000000e+00 : f32
    %15 = vector.broadcast %cst_11 : f32 to vector<512x64xf32>
    %16 = arith.maximumf %14, %15 : vector<512x64xf32>
    %17 = arith.truncf %16 : vector<512x64xf32> to vector<512x64xbf16>
    %c0_12 = arith.constant 0 : index
    %c0_13 = arith.constant 0 : index
    %18 = vector.load %arg4[%c0_12, %c0_13] : memref<64x64xbf16, #tpu.memory_space<vmem>>, vector<64x64xbf16>
    %cst_14 = arith.constant dense<0.000000e+00> : vector<512x64xf32>
    %19 = tpu.matmul %17, %18, %cst_14 {dimension_numbers = #tpu.dot_dimension_numbers<[1], [0], [0], [1], [0, 0, 1, 1], [], []>} : vector<512x64xbf16>, vector<64x64xbf16>, vector<512x64xf32> -> vector<512x64xf32>
    %c0_15 = arith.constant 0 : index
    %c0_16 = arith.constant 0 : index
    %20 = vector.load %arg9[%c0_15, %c0_16] : memref<1x64xf32, #tpu.memory_space<vmem>>, vector<1x64xf32>
    %21 = vector.broadcast %20 : vector<1x64xf32> to vector<512x64xf32>
    %22 = arith.addf %19, %21 : vector<512x64xf32>
    %cst_17 = arith.constant 0.000000e+00 : f32
    %23 = vector.broadcast %cst_17 : f32 to vector<512x64xf32>
    %24 = arith.maximumf %22, %23 : vector<512x64xf32>
    %25 = arith.truncf %24 : vector<512x64xf32> to vector<512x64xbf16>
    %c0_18 = arith.constant 0 : index
    %c0_19 = arith.constant 0 : index
    %26 = vector.load %arg5[%c0_18, %c0_19] : memref<64x128xbf16, #tpu.memory_space<vmem>>, vector<64x128xbf16>
    %cst_20 = arith.constant dense<0.000000e+00> : vector<512x128xf32>
    %27 = tpu.matmul %25, %26, %cst_20 {dimension_numbers = #tpu.dot_dimension_numbers<[1], [0], [0], [1], [0, 0, 1, 1], [], []>} : vector<512x64xbf16>, vector<64x128xbf16>, vector<512x128xf32> -> vector<512x128xf32>
    %c0_21 = arith.constant 0 : index
    %c0_22 = arith.constant 0 : index
    %28 = vector.load %arg10[%c0_21, %c0_22] : memref<1x128xf32, #tpu.memory_space<vmem>>, vector<1x128xf32>
    %29 = vector.broadcast %28 : vector<1x128xf32> to vector<512x128xf32>
    %30 = arith.addf %27, %29 : vector<512x128xf32>
    %cst_23 = arith.constant 0.000000e+00 : f32
    %31 = vector.broadcast %cst_23 : f32 to vector<512x128xf32>
    %32 = arith.maximumf %30, %31 : vector<512x128xf32>
    %33 = arith.truncf %32 : vector<512x128xf32> to vector<512x128xbf16>
    %c0_24 = arith.constant 0 : index
    %c0_25 = arith.constant 0 : index
    %34 = vector.load %arg6[%c0_24, %c0_25] : memref<128x32xbf16, #tpu.memory_space<vmem>>, vector<128x32xbf16>
    %cst_26 = arith.constant dense<0.000000e+00> : vector<512x32xf32>
    %35 = tpu.matmul %33, %34, %cst_26 {dimension_numbers = #tpu.dot_dimension_numbers<[1], [0], [0], [1], [0, 0, 1, 1], [], []>} : vector<512x128xbf16>, vector<128x32xbf16>, vector<512x32xf32> -> vector<512x32xf32>
    %c0_27 = arith.constant 0 : index
    %c0_28 = arith.constant 0 : index
    %36 = vector.load %arg11[%c0_27, %c0_28] : memref<1x32xf32, #tpu.memory_space<vmem>>, vector<1x32xf32>
    %37 = vector.broadcast %36 : vector<1x32xf32> to vector<512x32xf32>
    %38 = arith.addf %35, %37 : vector<512x32xf32>
    %c0_29 = arith.constant 0 : index
    %c0_30 = arith.constant 0 : index
    %39 = vector.load %arg12[%c0_29, %c0_30] : memref<512x32xf32, #tpu.memory_space<vmem>>, vector<512x32xf32>
    tpu.vector_store %arg12[%c0_29, %c0_30], %38 {strides = array<i32>} : memref<512x32xf32, #tpu.memory_space<vmem>>, vector<512x32xf32>,
    return
  }
  func.func @transform_0(%arg0: i32) -> (i32, i32) {
    %c0_i32 = arith.constant 0 : i32
    %c0_i32_0 = arith.constant 0 : i32
    return %arg0, %c0_i32 : i32, i32
  }
  func.func @transform_1(%arg0: i32) -> (i32, i32) {
    %c0_i32 = arith.constant 0 : i32
    %c0_i32_0 = arith.constant 0 : i32
    %c0_i32_1 = arith.constant 0 : i32
    return %c0_i32, %c0_i32_0 : i32, i32
  }
  func.func @transform_2(%arg0: i32) -> (i32, i32) {
    %c0_i32 = arith.constant 0 : i32
    %c0_i32_0 = arith.constant 0 : i32
    %c0_i32_1 = arith.constant 0 : i32
    return %c0_i32, %c0_i32_0 : i32, i32
  }
  func.func @transform_3(%arg0: i32) -> (i32, i32) {
    %c0_i32 = arith.constant 0 : i32
    %c0_i32_0 = arith.constant 0 : i32
    %c0_i32_1 = arith.constant 0 : i32
    return %c0_i32, %c0_i32_0 : i32, i32
  }
  func.func @transform_4(%arg0: i32) -> (i32, i32) {
    %c0_i32 = arith.constant 0 : i32
    %c0_i32_0 = arith.constant 0 : i32
    %c0_i32_1 = arith.constant 0 : i32
    return %c0_i32, %c0_i32_0 : i32, i32
  }
  func.func @transform_5(%arg0: i32) -> (i32, i32) {
    %c0_i32 = arith.constant 0 : i32
    %c0_i32_0 = arith.constant 0 : i32
    %c0_i32_1 = arith.constant 0 : i32
    return %c0_i32, %c0_i32_0 : i32, i32
  }
  func.func @transform_6(%arg0: i32) -> (i32, i32) {
    %c0_i32 = arith.constant 0 : i32
    %c0_i32_0 = arith.constant 0 : i32
    %c0_i32_1 = arith.constant 0 : i32
    return %c0_i32, %c0_i32_0 : i32, i32
  }
  func.func @transform_7(%arg0: i32) -> (i32, i32) {
    %c0_i32 = arith.constant 0 : i32
    %c0_i32_0 = arith.constant 0 : i32
    %c0_i32_1 = arith.constant 0 : i32
    return %c0_i32, %c0_i32_0 : i32, i32
  }
  func.func @transform_8(%arg0: i32) -> (i32, i32) {
    %c0_i32 = arith.constant 0 : i32
    %c0_i32_0 = arith.constant 0 : i32
    %c0_i32_1 = arith.constant 0 : i32
    return %c0_i32, %c0_i32_0 : i32, i32
  }
  func.func @transform_9(%arg0: i32) -> (i32, i32) {
    %c0_i32 = arith.constant 0 : i32
    %c0_i32_0 = arith.constant 0 : i32
    %c0_i32_1 = arith.constant 0 : i32
    return %c0_i32, %c0_i32_0 : i32, i32
  }
  func.func @transform_10(%arg0: i32) -> (i32, i32) {
    %c0_i32 = arith.constant 0 : i32
    %c0_i32_0 = arith.constant 0 : i32
    %c0_i32_1 = arith.constant 0 : i32
    return %c0_i32, %c0_i32_0 : i32, i32
  }
  func.func @transform_11(%arg0: i32) -> (i32, i32) {
    %c0_i32 = arith.constant 0 : i32
    %c0_i32_0 = arith.constant 0 : i32
    return %arg0, %c0_i32 : i32, i32
  }
}

</mosaic_0001>

<llo_original>
// kernel: tpu_custom_call.1
$region0: #{tpu_custom_call.1}
  #allocation0 [shape = 'u32[]', space=smem, size = 0x4, offset = 0x4, fixed_abs, tag = 'smem constant byte address 0x4 - core index']
  #allocation1 [shape = 'u32[144,128]{1,0:T(1,128)}', space=vmem, size = 0x12000, scoped, tag = 'internal scratch']
  %s0 = inlined_call_operand.vmem [shape: f32[512,32], index: 0, kind: input, shape index: {}]
  %s1 = inlined_call_operand.vmem [shape: bf16[32,128], index: 1, kind: input, shape index: {}]
  %s2 = inlined_call_operand.vmem [shape: bf16[128,64], index: 2, kind: input, shape index: {}]
  %s3 = inlined_call_operand.vmem [shape: bf16[64,64], index: 3, kind: input, shape index: {}]
  %s4 = inlined_call_operand.vmem [shape: bf16[64,128], index: 4, kind: input, shape index: {}]
  %s5 = inlined_call_operand.vmem [shape: bf16[128,32], index: 5, kind: input, shape index: {}]
  %s6 = inlined_call_operand.vmem [shape: f32[1,128], index: 6, kind: input, shape index: {}]
  %s7 = inlined_call_operand.vmem [shape: f32[1,64], index: 7, kind: input, shape index: {}]
  %s8 = inlined_call_operand.vmem [shape: f32[1,64], index: 8, kind: input, shape index: {}]
  %s9 = inlined_call_operand.vmem [shape: f32[1,128], index: 9, kind: input, shape index: {}]
  %s10 = inlined_call_operand.vmem [shape: f32[1,32], index: 10, kind: input, shape index: {}]
  %s11 = inlined_call_operand.vmem [shape: f32[512,32], index: 11, kind: output, shape index: {}]
  %s12 = sld [smem:[#allocation0]]
  $region54: #{tpu_custom_call.1} parent=0
    _
  %s14 = ssub.s32 1, %s12
  %s15 = scalar_select 0, %s14, %s12
  // Predicated region
  $region2: #{tpu_custom_call.1} parent=0 // pred_check
    _
  $region3: #{tpu_custom_call.1} parent=0 // pred_check_branch
    %17 = sbr.rel (0) target = $region5
  $region4: #{tpu_custom_call.1} parent=0 // pred_region
    _
  $region5: #{tpu_custom_call.1} parent=0 // pred_fallthru
    _
  // Predicated region
  $region6: #{tpu_custom_call.1} parent=0 // pred_check
    _
  $region7: #{tpu_custom_call.1} parent=0 // pred_check_branch
    %19 = sbr.rel (0) target = $region9
  $region8: #{tpu_custom_call.1} parent=0 // pred_region
    _
  $region9: #{tpu_custom_call.1} parent=0 // pred_fallthru
    _
  // Predicated region
  $region10: #{tpu_custom_call.1} parent=0 // pred_check
    _
  $region11: #{tpu_custom_call.1} parent=0 // pred_check_branch
    %21 = sbr.rel (0) target = $region13
  $region12: #{tpu_custom_call.1} parent=0 // pred_region
    _
  $region13: #{tpu_custom_call.1} parent=0 // pred_fallthru
    _
  // Predicated region
  $region14: #{tpu_custom_call.1} parent=0 // pred_check
    _
  $region15: #{tpu_custom_call.1} parent=0 // pred_check_branch
    %23 = sbr.rel (0) target = $region17
  $region16: #{tpu_custom_call.1} parent=0 // pred_region
    _
  $region17: #{tpu_custom_call.1} parent=0 // pred_fallthru
    _
  // Predicated region
  $region18: #{tpu_custom_call.1} parent=0 // pred_check
    _
  $region19: #{tpu_custom_call.1} parent=0 // pred_check_branch
    %25 = sbr.rel (0) target = $region21
  $region20: #{tpu_custom_call.1} parent=0 // pred_region
    _
  $region21: #{tpu_custom_call.1} parent=0 // pred_fallthru
    _
  // Predicated region
  $region22: #{tpu_custom_call.1} parent=0 // pred_check
    _
  $region23: #{tpu_custom_call.1} parent=0 // pred_check_branch
    %27 = sbr.rel (0) target = $region25
  $region24: #{tpu_custom_call.1} parent=0 // pred_region
    _
  $region25: #{tpu_custom_call.1} parent=0 // pred_fallthru
    _
  // Predicated region
  $region26: #{tpu_custom_call.1} parent=0 // pred_check
    _
  $region27: #{tpu_custom_call.1} parent=0 // pred_check_branch
    %29 = sbr.rel (0) target = $region29
  $region28: #{tpu_custom_call.1} parent=0 // pred_region
    _
  $region29: #{tpu_custom_call.1} parent=0 // pred_fallthru
    _
  // Predicated region
  $region30: #{tpu_custom_call.1} parent=0 // pred_check
    _
  $region31: #{tpu_custom_call.1} parent=0 // pred_check_branch
    %31 = sbr.rel (0) target = $region33
  $region32: #{tpu_custom_call.1} parent=0 // pred_region
    _
  $region33: #{tpu_custom_call.1} parent=0 // pred_fallthru
    _
  // Predicated region
  $region34: #{tpu_custom_call.1} parent=0 // pred_check
    _
  $region35: #{tpu_custom_call.1} parent=0 // pred_check_branch
    %33 = sbr.rel (0) target = $region37
  $region36: #{tpu_custom_call.1} parent=0 // pred_region
    _
  $region37: #{tpu_custom_call.1} parent=0 // pred_fallthru
    _
  // Predicated region
  $region38: #{tpu_custom_call.1} parent=0 // pred_check
    _
  $region39: #{tpu_custom_call.1} parent=0 // pred_check_branch
    %35 = sbr.rel (0) target = $region41
  $region40: #{tpu_custom_call.1} parent=0 // pred_region
    _
  $region41: #{tpu_custom_call.1} parent=0 // pred_fallthru
    _
  // Predicated region
  $region42: #{tpu_custom_call.1} parent=0 // pred_check
    _
  $region43: #{tpu_custom_call.1} parent=0 // pred_check_branch
    %37 = sbr.rel (0) target = $region45
  $region44: #{tpu_custom_call.1} parent=0 // pred_region
    _
  $region45: #{tpu_custom_call.1} parent=0 // pred_fallthru
    _
  %v39 = vld [vmem:[%s0] sm:$0xff]
  %v40 = vld [vmem:[%s0 + $0x8] sm:$0xff]
  %v41 = vld [vmem:[%s0 + $0x10] sm:$0xff]
  %v42 = vld [vmem:[%s0 + $0x18] sm:$0xff]
  %v43 = vld [vmem:[%s0 + $0x20] sm:$0xff]
  %v44 = vld [vmem:[%s0 + $0x28] sm:$0xff]
  %v45 = vld [vmem:[%s0 + $0x30] sm:$0xff]
  %v46 = vld [vmem:[%s0 + $0x38] sm:$0xff]
  %v47 = vld [vmem:[%s0 + $0x40] sm:$0xff]
  %v48 = vld [vmem:[%s0 + $0x48] sm:$0xff]
  %v49 = vld [vmem:[%s0 + $0x50] sm:$0xff]
  %v50 = vld [vmem:[%s0 + $0x58] sm:$0xff]
  %v51 = vld [vmem:[%s0 + $0x60] sm:$0xff]
  %v52 = vld [vmem:[%s0 + $0x68] sm:$0xff]
  %v53 = vld [vmem:[%s0 + $0x70] sm:$0xff]
  %v54 = vld [vmem:[%s0 + $0x78] sm:$0xff]
  %v55 = vld [vmem:[%s0 + $0x80] sm:$0xff]
  %v56 = vld [vmem:[%s0 + $0x88] sm:$0xff]
  %v57 = vld [vmem:[%s0 + $0x90] sm:$0xff]
  %v58 = vld [vmem:[%s0 + $0x98] sm:$0xff]
  %v59 = vld [vmem:[%s0 + $0xa0] sm:$0xff]
  %v60 = vld [vmem:[%s0 + $0xa8] sm:$0xff]
  %v61 = vld [vmem:[%s0 + $0xb0] sm:$0xff]
  %v62 = vld [vmem:[%s0 + $0xb8] sm:$0xff]
  %v63 = vld [vmem:[%s0 + $0xc0] sm:$0xff]
  %v64 = vld [vmem:[%s0 + $0xc8] sm:$0xff]
  %v65 = vld [vmem:[%s0 + $0xd0] sm:$0xff]
  %v66 = vld [vmem:[%s0 + $0xd8] sm:$0xff]
  %v67 = vld [vmem:[%s0 + $0xe0] sm:$0xff]
  %v68 = vld [vmem:[%s0 + $0xe8] sm:$0xff]
  %v69 = vld [vmem:[%s0 + $0xf0] sm:$0xff]
  %v70 = vld [vmem:[%s0 + $0xf8] sm:$0xff]
  %v71 = vld [vmem:[%s0 + $0x100] sm:$0xff]
  %v72 = vld [vmem:[%s0 + $0x108] sm:$0xff]
  %v73 = vld [vmem:[%s0 + $0x110] sm:$0xff]
  %v74 = vld [vmem:[%s0 + $0x118] sm:$0xff]
  %v75 = vld [vmem:[%s0 + $0x120] sm:$0xff]
  %v76 = vld [vmem:[%s0 + $0x128] sm:$0xff]
  %v77 = vld [vmem:[%s0 + $0x130] sm:$0xff]
  %v78 = vld [vmem:[%s0 + $0x138] sm:$0xff]
  %v79 = vld [vmem:[%s0 + $0x140] sm:$0xff]
  %v80 = vld [vmem:[%s0 + $0x148] sm:$0xff]
  %v81 = vld [vmem:[%s0 + $0x150] sm:$0xff]
  %v82 = vld [vmem:[%s0 + $0x158] sm:$0xff]
  %v83 = vld [vmem:[%s0 + $0x160] sm:$0xff]
  %v84 = vld [vmem:[%s0 + $0x168] sm:$0xff]
  %v85 = vld [vmem:[%s0 + $0x170] sm:$0xff]
  %v86 = vld [vmem:[%s0 + $0x178] sm:$0xff]
  %v87 = vld [vmem:[%s0 + $0x180] sm:$0xff]
  %v88 = vld [vmem:[%s0 + $0x188] sm:$0xff]
  %v89 = vld [vmem:[%s0 + $0x190] sm:$0xff]
  %v90 = vld [vmem:[%s0 + $0x198] sm:$0xff]
  %v91 = vld [vmem:[%s0 + $0x1a0] sm:$0xff]
  %v92 = vld [vmem:[%s0 + $0x1a8] sm:$0xff]
  %v93 = vld [vmem:[%s0 + $0x1b0] sm:$0xff]
  %v94 = vld [vmem:[%s0 + $0x1b8] sm:$0xff]
  %v95 = vld [vmem:[%s0 + $0x1c0] sm:$0xff]
  %v96 = vld [vmem:[%s0 + $0x1c8] sm:$0xff]
  %v97 = vld [vmem:[%s0 + $0x1d0] sm:$0xff]
  %v98 = vld [vmem:[%s0 + $0x1d8] sm:$0xff]
  %v99 = vld [vmem:[%s0 + $0x1e0] sm:$0xff]
  %v100 = vld [vmem:[%s0 + $0x1e8] sm:$0xff]
  %v101 = vld [vmem:[%s0 + $0x1f0] sm:$0xff]
  %v102 = vld [vmem:[%s0 + $0x1f8] sm:$0xff]
  %v103 = vpack.c.bf16 %v40, %v39
  %v104 = vpack.c.bf16 %v42, %v41
  %v105 = vpack.c.bf16 %v44, %v43
  %v106 = vpack.c.bf16 %v46, %v45
  %v107 = vpack.c.bf16 %v48, %v47
  %v108 = vpack.c.bf16 %v50, %v49
  %v109 = vpack.c.bf16 %v52, %v51
  %v110 = vpack.c.bf16 %v54, %v53
  %v111 = vpack.c.bf16 %v56, %v55
  %v112 = vpack.c.bf16 %v58, %v57
  %v113 = vpack.c.bf16 %v60, %v59
  %v114 = vpack.c.bf16 %v62, %v61
  %v115 = vpack.c.bf16 %v64, %v63
  %v116 = vpack.c.bf16 %v66, %v65
  %v117 = vpack.c.bf16 %v68, %v67
  %v118 = vpack.c.bf16 %v70, %v69
  %v119 = vpack.c.bf16 %v72, %v71
  %v120 = vpack.c.bf16 %v74, %v73
  %v121 = vpack.c.bf16 %v76, %v75
  %v122 = vpack.c.bf16 %v78, %v77
  %v123 = vpack.c.bf16 %v80, %v79
  %v124 = vpack.c.bf16 %v82, %v81
  %v125 = vpack.c.bf16 %v84, %v83
  %v126 = vpack.c.bf16 %v86, %v85
  %v127 = vpack.c.bf16 %v88, %v87
  %v128 = vpack.c.bf16 %v90, %v89
  %v129 = vpack.c.bf16 %v92, %v91
  %v130 = vpack.c.bf16 %v94, %v93
  %v131 = vpack.c.bf16 %v96, %v95
  %v132 = vpack.c.bf16 %v98, %v97
  %v133 = vpack.c.bf16 %v100, %v99
  %v134 = vpack.c.bf16 %v102, %v101
  %v135 = vld [vmem:[%s1] sm:$0xf]
  %v136 = vld [vmem:[%s1 + $0x4] sm:$0xf]
  %v137 = vld [vmem:[%s1 + $0x8] sm:$0xf]
  %v138 = vld [vmem:[%s1 + $0xc] sm:$0xf]
  %v139 = vld [vmem:[%s6] sm:$0x1]
  %v141 = vlaneseq
  %v142 = vshrl.u32 %v141, 7
  %v143 = vsub.s32 0, %v142
  %v144 = vrot.slane %v139, %v143
  %v150 = vunpack.c.l.b16 %v135
  %v151 = vunpack.c.l.b16 %v136
  %v152 = vunpack.c.l.b16 %v137
  %v153 = vunpack.c.l.b16 %v138
  %v154 = vpack.c.b16 %v151, %v150
  %v155 = vpack.c.b16 %v153, %v152
  %vm158 = vcmask 261120
  %v160 = vsel %vm158, %v103, 0
  %v163 = vsel %vm158, %v104, 0
  %v166 = vsel %vm158, %v105, 0
  %v169 = vsel %vm158, %v106, 0
  %v172 = vsel %vm158, %v107, 0
  %v175 = vsel %vm158, %v108, 0
  %v178 = vsel %vm158, %v109, 0
  %v181 = vsel %vm158, %v110, 0
  %v184 = vsel %vm158, %v111, 0
  %v187 = vsel %vm158, %v112, 0
  %v190 = vsel %vm158, %v113, 0
  %v193 = vsel %vm158, %v114, 0
  %v196 = vsel %vm158, %v115, 0
  %v199 = vsel %vm158, %v116, 0
  %v202 = vsel %vm158, %v117, 0
  %v205 = vsel %vm158, %v118, 0
  %v208 = vsel %vm158, %v119, 0
  %v211 = vsel %vm158, %v120, 0
  %v214 = vsel %vm158, %v121, 0
  %v217 = vsel %vm158, %v122, 0
  %v220 = vsel %vm158, %v123, 0
  %v223 = vsel %vm158, %v124, 0
  %v226 = vsel %vm158, %v125, 0
  %v229 = vsel %vm158, %v126, 0
  %v232 = vsel %vm158, %v127, 0
  %v235 = vsel %vm158, %v128, 0
  %v238 = vsel %vm158, %v129, 0
  %v241 = vsel %vm158, %v130, 0
  %v244 = vsel %vm158, %v131, 0
  %v247 = vsel %vm158, %v132, 0
  %v250 = vsel %vm158, %v133, 0
  %v253 = vsel %vm158, %v134, 0
  %255 = vmatprep.subr.bf16.mxu0 0
  %256 = vmatpush1.bf16.msra.mxu0 %v154
  %257 = vmatprep.subr.bf16.mxu0 0
  %258 = vmatpush1.bf16.msra.mxu0 %v155
  %259 = vmatprep.subr.bf16.mxu0 0
  %260 = vmatpush1.bf16.msra.mxu0 0
  %261 = vmatprep.subr.bf16.mxu0 0
  %262 = vmatpush1.bf16.msra.mxu0 0
  %263 = vmatprep.subr.bf16.mxu0 0
  %264 = vmatpush1.bf16.msra.mxu0 0
  %265 = vmatprep.subr.bf16.mxu0 0
  %266 = vmatpush1.bf16.msra.mxu0 0
  %267 = vmatprep.subr.bf16.mxu0 0
  %268 = vmatpush1.bf16.msra.mxu0 0
  %269 = vmatprep.subr.bf16.mxu0 0
  %270 = vmatpush1.bf16.msra.mxu0 0
  %271 = vmatprep.subr.bf16.mxu0 0
  %272 = vmatpush1.bf16.msra.mxu0 0
  %273 = vmatprep.subr.bf16.mxu0 0
  %274 = vmatpush1.bf16.msra.mxu0 0
  %275 = vmatprep.subr.bf16.mxu0 0
  %276 = vmatpush1.bf16.msra.mxu0 0
  %277 = vmatprep.subr.bf16.mxu0 0
  %278 = vmatpush1.bf16.msra.mxu0 0
  %279 = vmatprep.subr.bf16.mxu0 0
  %280 = vmatpush1.bf16.msra.mxu0 0
  %281 = vmatprep.subr.bf16.mxu0 0
  %282 = vmatpush1.bf16.msra.mxu0 0
  %283 = vmatprep.subr.bf16.mxu0 0
  %284 = vmatpush1.bf16.msra.mxu0 0
  %285 = vmatprep.subr.bf16.mxu0 0
  %286 = vmatpush1.bf16.msra.mxu0 0
  %287 = vmatprep.mubr.bf16.mxu0 0
  %288 = vmatmul.mubr.bf16.gmra.mrb[0].mxu0 %v160
  %v289 = vpop.f32.mrb[0].mxu0
  %v290 = vadd.f32 %v144, %v289
  %v291 = vpop.f32.mrb[0].mxu0
  %v292 = vpop.f32.mrb[0].mxu0
  %v293 = vadd.f32 %v144, %v292
  %v294 = vpop.f32.mrb[0].mxu0
  %295 = vmatprep.mubr.bf16.mxu0 0
  %296 = vmatmul.mubr.bf16.gmra.mrb[0].mxu0 %v163
  %v297 = vpop.f32.mrb[0].mxu0
  %v298 = vadd.f32 %v144, %v297
  %v299 = vpop.f32.mrb[0].mxu0
  %v300 = vpop.f32.mrb[0].mxu0
  %v301 = vadd.f32 %v144, %v300
  %v302 = vpop.f32.mrb[0].mxu0
  %303 = vmatprep.mubr.bf16.mxu0 0
  %304 = vmatmul.mubr.bf16.gmra.mrb[0].mxu0 %v166
  %v305 = vpop.f32.mrb[0].mxu0
  %v306 = vadd.f32 %v144, %v305
  %v307 = vpop.f32.mrb[0].mxu0
  %v308 = vpop.f32.mrb[0].mxu0
  %v309 = vadd.f32 %v144, %v308
  %v310 = vpop.f32.mrb[0].mxu0
  %311 = vmatprep.mubr.bf16.mxu0 0
  %312 = vmatmul.mubr.bf16.gmra.mrb[0].mxu0 %v169
  %v313 = vpop.f32.mrb[0].mxu0
  %v314 = vadd.f32 %v144, %v313
  %v315 = vpop.f32.mrb[0].mxu0
  %v316 = vpop.f32.mrb[0].mxu0
  %v317 = vadd.f32 %v144, %v316
  %v318 = vpop.f32.mrb[0].mxu0
  %319 = vmatprep.mubr.bf16.mxu0 0
  %320 = vmatmul.mubr.bf16.gmra.mrb[0].mxu0 %v172
  %v321 = vpop.f32.mrb[0].mxu0
  %v322 = vadd.f32 %v144, %v321
  %v323 = vpop.f32.mrb[0].mxu0
  %v324 = vpop.f32.mrb[0].mxu0
  %v325 = vadd.f32 %v144, %v324
  %v326 = vpop.f32.mrb[0].mxu0
  %327 = vmatprep.mubr.bf16.mxu0 0
  %328 = vmatmul.mubr.bf16.gmra.mrb[0].mxu0 %v175
  %v329 = vpop.f32.mrb[0].mxu0
  %v330 = vadd.f32 %v144, %v329
  %v331 = vpop.f32.mrb[0].mxu0
  %v332 = vpop.f32.mrb[0].mxu0
  %v333 = vadd.f32 %v144, %v332
  %v334 = vpop.f32.mrb[0].mxu0
  %335 = vmatprep.mubr.bf16.mxu0 0
  %336 = vmatmul.mubr.bf16.gmra.mrb[0].mxu0 %v178
  %v337 = vpop.f32.mrb[0].mxu0
  %v338 = vadd.f32 %v144, %v337
  %v339 = vpop.f32.mrb[0].mxu0
  %v340 = vpop.f32.mrb[0].mxu0
  %v341 = vadd.f32 %v144, %v340
  %v342 = vpop.f32.mrb[0].mxu0
  %343 = vmatprep.mubr.bf16.mxu0 0
  %344 = vmatmul.mubr.bf16.gmra.mrb[0].mxu0 %v181
  %v345 = vpop.f32.mrb[0].mxu0
  %v346 = vadd.f32 %v144, %v345
  %v347 = vpop.f32.mrb[0].mxu0
  %v348 = vpop.f32.mrb[0].mxu0
  %v349 = vadd.f32 %v144, %v348
  %v350 = vpop.f32.mrb[0].mxu0
  %351 = vmatprep.mubr.bf16.mxu0 0
  %352 = vmatmul.mubr.bf16.gmra.mrb[0].mxu0 %v184
  %v353 = vpop.f32.mrb[0].mxu0
  %v354 = vadd.f32 %v144, %v353
  %v355 = vpop.f32.mrb[0].mxu0
  %v356 = vpop.f32.mrb[0].mxu0
  %v357 = vadd.f32 %v144, %v356
  %v358 = vpop.f32.mrb[0].mxu0
  %359 = vmatprep.mubr.bf16.mxu0 0
  %360 = vmatmul.mubr.bf16.gmra.mrb[0].mxu0 %v187
  %v361 = vpop.f32.mrb[0].mxu0
  %v362 = vadd.f32 %v144, %v361
  %v363 = vpop.f32.mrb[0].mxu0
  %v364 = vpop.f32.mrb[0].mxu0
  %v365 = vadd.f32 %v144, %v364
  %v366 = vpop.f32.mrb[0].mxu0
  %367 = vmatprep.mubr.bf16.mxu0 0
  %368 = vmatmul.mubr.bf16.gmra.mrb[0].mxu0 %v190
  %v369 = vpop.f32.mrb[0].mxu0
  %v370 = vadd.f32 %v144, %v369
  %v371 = vpop.f32.mrb[0].mxu0
  %v372 = vpop.f32.mrb[0].mxu0
  %v373 = vadd.f32 %v144, %v372
  %v374 = vpop.f32.mrb[0].mxu0
  %375 = vmatprep.mubr.bf16.mxu0 0
  %376 = vmatmul.mubr.bf16.gmra.mrb[0].mxu0 %v193
  %v377 = vpop.f32.mrb[0].mxu0
  %v378 = vadd.f32 %v144, %v377
  %v379 = vpop.f32.mrb[0].mxu0
  %v380 = vpop.f32.mrb[0].mxu0
  %v381 = vadd.f32 %v144, %v380
  %v382 = vpop.f32.mrb[0].mxu0
  %383 = vmatprep.mubr.bf16.mxu0 0
  %384 = vmatmul.mubr.bf16.gmra.mrb[0].mxu0 %v196
  %v385 = vpop.f32.mrb[0].mxu0
  %v386 = vadd.f32 %v144, %v385
  %v387 = vpop.f32.mrb[0].mxu0
  %v388 = vpop.f32.mrb[0].mxu0
  %v389 = vadd.f32 %v144, %v388
  %v390 = vpop.f32.mrb[0].mxu0
  %391 = vmatprep.mubr.bf16.mxu0 0
  %392 = vmatmul.mubr.bf16.gmra.mrb[0].mxu0 %v199
  %v393 = vpop.f32.mrb[0].mxu0
  %v394 = vadd.f32 %v144, %v393
  %v395 = vpop.f32.mrb[0].mxu0
  %v396 = vpop.f32.mrb[0].mxu0
  %v397 = vadd.f32 %v144, %v396
  %v398 = vpop.f32.mrb[0].mxu0
  %399 = vmatprep.mubr.bf16.mxu0 0
  %400 = vmatmul.mubr.bf16.gmra.mrb[0].mxu0 %v202
  %v401 = vpop.f32.mrb[0].mxu0
  %v402 = vadd.f32 %v144, %v401
  %v403 = vpop.f32.mrb[0].mxu0
  %v404 = vpop.f32.mrb[0].mxu0
  %v405 = vadd.f32 %v144, %v404
  %v406 = vpop.f32.mrb[0].mxu0
  %407 = vmatprep.mubr.bf16.mxu0 0
  %408 = vmatmul.mubr.bf16.gmra.mrb[0].mxu0 %v205
  %v409 = vpop.f32.mrb[0].mxu0
  %v410 = vadd.f32 %v144, %v409
  %v411 = vpop.f32.mrb[0].mxu0
  %v412 = vpop.f32.mrb[0].mxu0
  %v413 = vadd.f32 %v144, %v412
  %v414 = vpop.f32.mrb[0].mxu0
  %415 = vmatprep.mubr.bf16.mxu0 0
  %416 = vmatmul.mubr.bf16.gmra.mrb[0].mxu0 %v208
  %v417 = vpop.f32.mrb[0].mxu0
  %v418 = vadd.f32 %v144, %v417
  %v419 = vpop.f32.mrb[0].mxu0
  %v420 = vpop.f32.mrb[0].mxu0
  %v421 = vadd.f32 %v144, %v420
  %v422 = vpop.f32.mrb[0].mxu0
  %423 = vmatprep.mubr.bf16.mxu0 0
  %424 = vmatmul.mubr.bf16.gmra.mrb[0].mxu0 %v211
  %v425 = vpop.f32.mrb[0].mxu0
  %v426 = vadd.f32 %v144, %v425
  %v427 = vpop.f32.mrb[0].mxu0
  %v428 = vpop.f32.mrb[0].mxu0
  %v429 = vadd.f32 %v144, %v428
  %v430 = vpop.f32.mrb[0].mxu0
  %431 = vmatprep.mubr.bf16.mxu0 0
  %432 = vmatmul.mubr.bf16.gmra.mrb[0].mxu0 %v214
  %v433 = vpop.f32.mrb[0].mxu0
  %v434 = vadd.f32 %v144, %v433
  %v435 = vpop.f32.mrb[0].mxu0
  %v436 = vpop.f32.mrb[0].mxu0
  %v437 = vadd.f32 %v144, %v436
  %v438 = vpop.f32.mrb[0].mxu0
  %439 = vmatprep.mubr.bf16.mxu0 0
  %440 = vmatmul.mubr.bf16.gmra.mrb[0].mxu0 %v217
  %v441 = vpop.f32.mrb[0].mxu0
  %v442 = vadd.f32 %v144, %v441
  %v443 = vpop.f32.mrb[0].mxu0
  %v444 = vpop.f32.mrb[0].mxu0
  %v445 = vadd.f32 %v144, %v444
  %v446 = vpop.f32.mrb[0].mxu0
  %447 = vmatprep.mubr.bf16.mxu0 0
  %448 = vmatmul.mubr.bf16.gmra.mrb[0].mxu0 %v220
  %v449 = vpop.f32.mrb[0].mxu0
  %v450 = vadd.f32 %v144, %v449
  %v451 = vpop.f32.mrb[0].mxu0
  %v452 = vpop.f32.mrb[0].mxu0
  %v453 = vadd.f32 %v144, %v452
  %v454 = vpop.f32.mrb[0].mxu0
  %455 = vmatprep.mubr.bf16.mxu0 0
  %456 = vmatmul.mubr.bf16.gmra.mrb[0].mxu0 %v223
  %v457 = vpop.f32.mrb[0].mxu0
  %v458 = vadd.f32 %v144, %v457
  %v459 = vpop.f32.mrb[0].mxu0
  %v460 = vpop.f32.mrb[0].mxu0
  %v461 = vadd.f32 %v144, %v460
  %v462 = vpop.f32.mrb[0].mxu0
  %463 = vmatprep.mubr.bf16.mxu0 0
  %464 = vmatmul.mubr.bf16.gmra.mrb[0].mxu0 %v226
  %v465 = vpop.f32.mrb[0].mxu0
  %v466 = vadd.f32 %v144, %v465
  %v467 = vpop.f32.mrb[0].mxu0
  %v468 = vpop.f32.mrb[0].mxu0
  %v469 = vadd.f32 %v144, %v468
  %v470 = vpop.f32.mrb[0].mxu0
  %471 = vmatprep.mubr.bf16.mxu0 0
  %472 = vmatmul.mubr.bf16.gmra.mrb[0].mxu0 %v229
  %v473 = vpop.f32.mrb[0].mxu0
  %v474 = vadd.f32 %v144, %v473
  %v475 = vpop.f32.mrb[0].mxu0
  %v476 = vpop.f32.mrb[0].mxu0
  %v477 = vadd.f32 %v144, %v476
  %v478 = vpop.f32.mrb[0].mxu0
  %479 = vmatprep.mubr.bf16.mxu0 0
  %480 = vmatmul.mubr.bf16.gmra.mrb[0].mxu0 %v232
  %v481 = vpop.f32.mrb[0].mxu0
  %v482 = vadd.f32 %v144, %v481
  %v483 = vpop.f32.mrb[0].mxu0
  %v484 = vpop.f32.mrb[0].mxu0
  %v485 = vadd.f32 %v144, %v484
  %v486 = vpop.f32.mrb[0].mxu0
  %487 = vmatprep.mubr.bf16.mxu0 0
  %488 = vmatmul.mubr.bf16.gmra.mrb[0].mxu0 %v235
  %v489 = vpop.f32.mrb[0].mxu0
  %v490 = vadd.f32 %v144, %v489
  %v491 = vpop.f32.mrb[0].mxu0
  %v492 = vpop.f32.mrb[0].mxu0
  %v493 = vadd.f32 %v144, %v492
  %v494 = vpop.f32.mrb[0].mxu0
  %495 = vmatprep.mubr.bf16.mxu0 0
  %496 = vmatmul.mubr.bf16.gmra.mrb[0].mxu0 %v238
  %v497 = vpop.f32.mrb[0].mxu0
  %v498 = vadd.f32 %v144, %v497
  %v499 = vpop.f32.mrb[0].mxu0
  %v500 = vpop.f32.mrb[0].mxu0
  %v501 = vadd.f32 %v144, %v500
  %v502 = vpop.f32.mrb[0].mxu0
  %503 = vmatprep.mubr.bf16.mxu0 0
  %504 = vmatmul.mubr.bf16.gmra.mrb[0].mxu0 %v241
  %v505 = vpop.f32.mrb[0].mxu0
  %v506 = vadd.f32 %v144, %v505
  %v507 = vpop.f32.mrb[0].mxu0
  %v508 = vpop.f32.mrb[0].mxu0
  %v509 = vadd.f32 %v144, %v508
  %v510 = vpop.f32.mrb[0].mxu0
  %511 = vmatprep.mubr.bf16.mxu0 0
  %512 = vmatmul.mubr.bf16.gmra.mrb[0].mxu0 %v244
  %v513 = vpop.f32.mrb[0].mxu0
  %v514 = vadd.f32 %v144, %v513
  %v515 = vpop.f32.mrb[0].mxu0
  %v516 = vpop.f32.mrb[0].mxu0
  %v517 = vadd.f32 %v144, %v516
  %v518 = vpop.f32.mrb[0].mxu0
  %519 = vmatprep.mubr.bf16.mxu0 0
  %520 = vmatmul.mubr.bf16.gmra.mrb[0].mxu0 %v247
  %v521 = vpop.f32.mrb[0].mxu0
  %v522 = vadd.f32 %v144, %v521
  %v523 = vpop.f32.mrb[0].mxu0
  %v524 = vpop.f32.mrb[0].mxu0
  %v525 = vadd.f32 %v144, %v524
  %v526 = vpop.f32.mrb[0].mxu0
  %527 = vmatprep.mubr.bf16.mxu0 0
  %528 = vmatmul.mubr.bf16.gmra.mrb[0].mxu0 %v250
  %v529 = vpop.f32.mrb[0].mxu0
  %v530 = vadd.f32 %v144, %v529
  %v531 = vpop.f32.mrb[0].mxu0
  %v532 = vpop.f32.mrb[0].mxu0
  %v533 = vadd.f32 %v144, %v532
  %v534 = vpop.f32.mrb[0].mxu0
  %535 = vmatprep.mubr.bf16.mxu0 0
  %536 = vmatmul.mubr.bf16.gmra.mrb[0].mxu0 %v253
  %v537 = vpop.f32.mrb[0].mxu0
  %v538 = vadd.f32 %v144, %v537
  %v539 = vpop.f32.mrb[0].mxu0
  %v540 = vpop.f32.mrb[0].mxu0
  %v541 = vadd.f32 %v144, %v540
  %v542 = vpop.f32.mrb[0].mxu0
  %543 = vdwg.mxu0
  %v544 = vmax.f32 %v290, 0.0
  %v545 = vmax.f32 %v293, 0.0
  %v546 = vmax.f32 %v298, 0.0
  %v547 = vmax.f32 %v301, 0.0
  %v548 = vmax.f32 %v306, 0.0
  %v549 = vmax.f32 %v309, 0.0
  %v550 = vmax.f32 %v314, 0.0
  %v551 = vmax.f32 %v317, 0.0
  %v552 = vmax.f32 %v322, 0.0
  %v553 = vmax.f32 %v325, 0.0
  %v554 = vmax.f32 %v330, 0.0
  %v555 = vmax.f32 %v333, 0.0
  %v556 = vmax.f32 %v338, 0.0
  %v557 = vmax.f32 %v341, 0.0
  %v558 = vmax.f32 %v346, 0.0
  %v559 = vmax.f32 %v349, 0.0
  %v560 = vmax.f32 %v354, 0.0
  %v561 = vmax.f32 %v357, 0.0
  %v562 = vmax.f32 %v362, 0.0
  %v563 = vmax.f32 %v365, 0.0
  %v564 = vmax.f32 %v370, 0.0
  %v565 = vmax.f32 %v373, 0.0
  %v566 = vmax.f32 %v378, 0.0
  %v567 = vmax.f32 %v381, 0.0
  %v568 = vmax.f32 %v386, 0.0
  %v569 = vmax.f32 %v389, 0.0
  %v570 = vmax.f32 %v394, 0.0
  %v571 = vmax.f32 %v397, 0.0
  %v572 = vmax.f32 %v402, 0.0
  %v573 = vmax.f32 %v405, 0.0
  %v574 = vmax.f32 %v410, 0.0
  %v575 = vmax.f32 %v413, 0.0
  %v576 = vmax.f32 %v418, 0.0
  %v577 = vmax.f32 %v421, 0.0
  %v578 = vmax.f32 %v426, 0.0
  %v579 = vmax.f32 %v429, 0.0
  %v580 = vmax.f32 %v434, 0.0
  %v581 = vmax.f32 %v437, 0.0
  %v582 = vmax.f32 %v442, 0.0
  %v583 = vmax.f32 %v445, 0.0
  %v584 = vmax.f32 %v450, 0.0
  %v585 = vmax.f32 %v453, 0.0
  %v586 = vmax.f32 %v458, 0.0
  %v587 = vmax.f32 %v461, 0.0
  %v588 = vmax.f32 %v466, 0.0
  %v589 = vmax.f32 %v469, 0.0
  %v590 = vmax.f32 %v474, 0.0
  %v591 = vmax.f32 %v477, 0.0
  %v592 = vmax.f32 %v482, 0.0
  %v593 = vmax.f32 %v485, 0.0
  %v594 = vmax.f32 %v490, 0.0
  %v595 = vmax.f32 %v493, 0.0
  %v596 = vmax.f32 %v498, 0.0
  %v597 = vmax.f32 %v501, 0.0
  %v598 = vmax.f32 %v506, 0.0
  %v599 = vmax.f32 %v509, 0.0
  %v600 = vmax.f32 %v514, 0.0
  %v601 = vmax.f32 %v517, 0.0
  %v602 = vmax.f32 %v522, 0.0
  %v603 = vmax.f32 %v525, 0.0
  %v604 = vmax.f32 %v530, 0.0
  %v605 = vmax.f32 %v533, 0.0
  %v606 = vmax.f32 %v538, 0.0
  %v607 = vmax.f32 %v541, 0.0
  %v608 = vpack.c.bf16 %v545, %v544
  %v609 = vpack.c.bf16 %v547, %v546
  %v610 = vpack.c.bf16 %v549, %v548
  %v611 = vpack.c.bf16 %v551, %v550
  %v612 = vpack.c.bf16 %v553, %v552
  %v613 = vpack.c.bf16 %v555, %v554
  %v614 = vpack.c.bf16 %v557, %v556
  %v615 = vpack.c.bf16 %v559, %v558
  %v616 = vpack.c.bf16 %v561, %v560
  %v617 = vpack.c.bf16 %v563, %v562
  %v618 = vpack.c.bf16 %v565, %v564
  %v619 = vpack.c.bf16 %v567, %v566
  %v620 = vpack.c.bf16 %v569, %v568
  %v621 = vpack.c.bf16 %v571, %v570
  %v622 = vpack.c.bf16 %v573, %v572
  %v623 = vpack.c.bf16 %v575, %v574
  %v624 = vpack.c.bf16 %v577, %v576
  %v625 = vpack.c.bf16 %v579, %v578
  %v626 = vpack.c.bf16 %v581, %v580
  %v627 = vpack.c.bf16 %v583, %v582
  %v628 = vpack.c.bf16 %v585, %v584
  %v629 = vpack.c.bf16 %v587, %v586
  %v630 = vpack.c.bf16 %v589, %v588
  %v631 = vpack.c.bf16 %v591, %v590
  %v632 = vpack.c.bf16 %v593, %v592
  %v633 = vpack.c.bf16 %v595, %v594
  %v634 = vpack.c.bf16 %v597, %v596
  %v635 = vpack.c.bf16 %v599, %v598
  %v636 = vpack.c.bf16 %v601, %v600
  %v637 = vpack.c.bf16 %v603, %v602
  %v638 = vpack.c.bf16 %v605, %v604
  %v639 = vpack.c.bf16 %v607, %v606
  %v640 = vld [vmem:[%s2] sm:$0xf]
  %v641 = vld [vmem:[%s2 + $0x4] sm:$0xf]
  %v642 = vld [vmem:[%s2 + $0x8] sm:$0xf]
  %v643 = vld [vmem:[%s2 + $0xc] sm:$0xf]
  %v644 = vld [vmem:[%s2 + $0x10] sm:$0xf]
  %v645 = vld [vmem:[%s2 + $0x14] sm:$0xf]
  %v646 = vld [vmem:[%s2 + $0x18] sm:$0xf]
  %v647 = vld [vmem:[%s2 + $0x1c] sm:$0xf]
  %v648 = vld [vmem:[%s2 + $0x20] sm:$0xf]
  %v649 = vld [vmem:[%s2 + $0x24] sm:$0xf]
  %v650 = vld [vmem:[%s2 + $0x28] sm:$0xf]
  %v651 = vld [vmem:[%s2 + $0x2c] sm:$0xf]
  %v652 = vld [vmem:[%s2 + $0x30] sm:$0xf]
  %v653 = vld [vmem:[%s2 + $0x34] sm:$0xf]
  %v654 = vld [vmem:[%s2 + $0x38] sm:$0xf]
  %v655 = vld [vmem:[%s2 + $0x3c] sm:$0xf]
  %v656 = vld [vmem:[%s7] sm:$0x1]
  %v658 = vlaneseq
  %v659 = vshrl.u32 %v658, 7
  %v660 = vsub.s32 0, %v659
  %v661 = vrot.slane %v656, %v660
  %v679 = vunpack.c.l.b16 %v640
  %v680 = vunpack.c.l.b16 %v641
  %v681 = vunpack.c.l.b16 %v642
  %v682 = vunpack.c.l.b16 %v643
  %v683 = vunpack.c.l.b16 %v644
  %v684 = vunpack.c.l.b16 %v645
  %v685 = vunpack.c.l.b16 %v646
  %v686 = vunpack.c.l.b16 %v647
  %v687 = vunpack.c.l.b16 %v648
  %v688 = vunpack.c.l.b16 %v649
  %v689 = vunpack.c.l.b16 %v650
  %v690 = vunpack.c.l.b16 %v651
  %v691 = vunpack.c.l.b16 %v652
  %v692 = vunpack.c.l.b16 %v653
  %v693 = vunpack.c.l.b16 %v654
  %v694 = vunpack.c.l.b16 %v655
  %v695 = vpack.c.b16 %v680, %v679
  %v696 = vpack.c.b16 %v682, %v681
  %v697 = vpack.c.b16 %v684, %v683
  %v698 = vpack.c.b16 %v686, %v685
  %v699 = vpack.c.b16 %v688, %v687
  %v700 = vpack.c.b16 %v690, %v689
  %v701 = vpack.c.b16 %v692, %v691
  %v702 = vpack.c.b16 %v694, %v693
  %711 = vmatprep.subr.bf16.mxu0 0
  %712 = vmatpush1.bf16.msra.mxu0 %v695
  %713 = vmatprep.subr.bf16.mxu0 0
  %714 = vmatpush1.bf16.msra.mxu0 %v696
  %715 = vmatprep.subr.bf16.mxu0 0
  %716 = vmatpush1.bf16.msra.mxu0 %v697
  %717 = vmatprep.subr.bf16.mxu0 0
  %718 = vmatpush1.bf16.msra.mxu0 %v698
  %719 = vmatprep.subr.bf16.mxu0 0
  %720 = vmatpush1.bf16.msra.mxu0 %v699
  %721 = vmatprep.subr.bf16.mxu0 0
  %722 = vmatpush1.bf16.msra.mxu0 %v700
  %723 = vmatprep.subr.bf16.mxu0 0
  %724 = vmatpush1.bf16.msra.mxu0 %v701
  %725 = vmatprep.subr.bf16.mxu0 0
  %726 = vmatpush1.bf16.msra.mxu0 %v702
  %727 = vmatprep.subr.bf16.mxu0 0
  %728 = vmatpush1.bf16.msra.mxu0 0
  %729 = vmatprep.subr.bf16.mxu0 0
  %730 = vmatpush1.bf16.msra.mxu0 0
  %731 = vmatprep.subr.bf16.mxu0 0
  %732 = vmatpush1.bf16.msra.mxu0 0
  %733 = vmatprep.subr.bf16.mxu0 0
  %734 = vmatpush1.bf16.msra.mxu0 0
  %735 = vmatprep.subr.bf16.mxu0 0
  %736 = vmatpush1.bf16.msra.mxu0 0
  %737 = vmatprep.subr.bf16.mxu0 0
  %738 = vmatpush1.bf16.msra.mxu0 0
  %739 = vmatprep.subr.bf16.mxu0 0
  %740 = vmatpush1.bf16.msra.mxu0 0
  %741 = vmatprep.subr.bf16.mxu0 0
  %742 = vmatpush1.bf16.msra.mxu0 0
  %743 = vmatprep.mubr.bf16.mxu0 0
  %744 = vmatmul.mubr.bf16.gmra.mrb[0].mxu0 %v608
  %v745 = vpop.f32.mrb[0].mxu0
  %v746 = vadd.f32 %v661, %v745
  %v747 = vpop.f32.mrb[0].mxu0
  %v748 = vpop.f32.mrb[0].mxu0
  %v749 = vadd.f32 %v661, %v748
  %v750 = vpop.f32.mrb[0].mxu0
  %751 = vmatprep.mubr.bf16.mxu0 0
  %752 = vmatmul.mubr.bf16.gmra.mrb[0].mxu0 %v609
  %v753 = vpop.f32.mrb[0].mxu0
  %v754 = vadd.f32 %v661, %v753
  %v755 = vpop.f32.mrb[0].mxu0
  %v756 = vpop.f32.mrb[0].mxu0
  %v757 = vadd.f32 %v661, %v756
  %v758 = vpop.f32.mrb[0].mxu0
  %759 = vmatprep.mubr.bf16.mxu0 0
  %760 = vmatmul.mubr.bf16.gmra.mrb[0].mxu0 %v610
  %v761 = vpop.f32.mrb[0].mxu0
  %v762 = vadd.f32 %v661, %v761
  %v763 = vpop.f32.mrb[0].mxu0
  %v764 = vpop.f32.mrb[0].mxu0
  %v765 = vadd.f32 %v661, %v764
  %v766 = vpop.f32.mrb[0].mxu0
  %767 = vmatprep.mubr.bf16.mxu0 0
  %768 = vmatmul.mubr.bf16.gmra.mrb[0].mxu0 %v611
  %v769 = vpop.f32.mrb[0].mxu0
  %v770 = vadd.f32 %v661, %v769
  %v771 = vpop.f32.mrb[0].mxu0
  %v772 = vpop.f32.mrb[0].mxu0
  %v773 = vadd.f32 %v661, %v772
  %v774 = vpop.f32.mrb[0].mxu0
  %775 = vmatprep.mubr.bf16.mxu0 0
  %776 = vmatmul.mubr.bf16.gmra.mrb[0].mxu0 %v612
  %v777 = vpop.f32.mrb[0].mxu0
  %v778 = vadd.f32 %v661, %v777
  %v779 = vpop.f32.mrb[0].mxu0
  %v780 = vpop.f32.mrb[0].mxu0
  %v781 = vadd.f32 %v661, %v780
  %v782 = vpop.f32.mrb[0].mxu0
  %783 = vmatprep.mubr.bf16.mxu0 0
  %784 = vmatmul.mubr.bf16.gmra.mrb[0].mxu0 %v613
  %v785 = vpop.f32.mrb[0].mxu0
  %v786 = vadd.f32 %v661, %v785
  %v787 = vpop.f32.mrb[0].mxu0
  %v788 = vpop.f32.mrb[0].mxu0
  %v789 = vadd.f32 %v661, %v788
  %v790 = vpop.f32.mrb[0].mxu0
  %791 = vmatprep.mubr.bf16.mxu0 0
  %792 = vmatmul.mubr.bf16.gmra.mrb[0].mxu0 %v614
  %v793 = vpop.f32.mrb[0].mxu0
  %v794 = vadd.f32 %v661, %v793
  %v795 = vpop.f32.mrb[0].mxu0
  %v796 = vpop.f32.mrb[0].mxu0
  %v797 = vadd.f32 %v661, %v796
  %v798 = vpop.f32.mrb[0].mxu0
  %799 = vmatprep.mubr.bf16.mxu0 0
  %800 = vmatmul.mubr.bf16.gmra.mrb[0].mxu0 %v615
  %v801 = vpop.f32.mrb[0].mxu0
  %v802 = vadd.f32 %v661, %v801
  %v803 = vpop.f32.mrb[0].mxu0
  %v804 = vpop.f32.mrb[0].mxu0
  %v805 = vadd.f32 %v661, %v804
  %v806 = vpop.f32.mrb[0].mxu0
  %807 = vmatprep.mubr.bf16.mxu0 0
  %808 = vmatmul.mubr.bf16.gmra.mrb[0].mxu0 %v616
  %v809 = vpop.f32.mrb[0].mxu0
  %v810 = vadd.f32 %v661, %v809
  %v811 = vpop.f32.mrb[0].mxu0
  %v812 = vpop.f32.mrb[0].mxu0
  %v813 = vadd.f32 %v661, %v812
  %v814 = vpop.f32.mrb[0].mxu0
  %815 = vmatprep.mubr.bf16.mxu0 0
  %816 = vmatmul.mubr.bf16.gmra.mrb[0].mxu0 %v617
  %v817 = vpop.f32.mrb[0].mxu0
  %v818 = vadd.f32 %v661, %v817
  %v819 = vpop.f32.mrb[0].mxu0
  %v820 = vpop.f32.mrb[0].mxu0
  %v821 = vadd.f32 %v661, %v820
  %v822 = vpop.f32.mrb[0].mxu0
  %823 = vmatprep.mubr.bf16.mxu0 0
  %824 = vmatmul.mubr.bf16.gmra.mrb[0].mxu0 %v618
  %v825 = vpop.f32.mrb[0].mxu0
  %v826 = vadd.f32 %v661, %v825
  %v827 = vpop.f32.mrb[0].mxu0
  %v828 = vpop.f32.mrb[0].mxu0
  %v829 = vadd.f32 %v661, %v828
  %v830 = vpop.f32.mrb[0].mxu0
  %831 = vmatprep.mubr.bf16.mxu0 0
  %832 = vmatmul.mubr.bf16.gmra.mrb[0].mxu0 %v619
  %v833 = vpop.f32.mrb[0].mxu0
  %v834 = vadd.f32 %v661, %v833
  %v835 = vpop.f32.mrb[0].mxu0
  %v836 = vpop.f32.mrb[0].mxu0
  %v837 = vadd.f32 %v661, %v836
  %v838 = vpop.f32.mrb[0].mxu0
  %839 = vmatprep.mubr.bf16.mxu0 0
  %840 = vmatmul.mubr.bf16.gmra.mrb[0].mxu0 %v620
  %v841 = vpop.f32.mrb[0].mxu0
  %v842 = vadd.f32 %v661, %v841
  %v843 = vpop.f32.mrb[0].mxu0
  %v844 = vpop.f32.mrb[0].mxu0
  %v845 = vadd.f32 %v661, %v844
  %v846 = vpop.f32.mrb[0].mxu0
  %847 = vmatprep.mubr.bf16.mxu0 0
  %848 = vmatmul.mubr.bf16.gmra.mrb[0].mxu0 %v621
  %v849 = vpop.f32.mrb[0].mxu0
  %v850 = vadd.f32 %v661, %v849
  %v851 = vpop.f32.mrb[0].mxu0
  %v852 = vpop.f32.mrb[0].mxu0
  %v853 = vadd.f32 %v661, %v852
  %v854 = vpop.f32.mrb[0].mxu0
  %855 = vmatprep.mubr.bf16.mxu0 0
  %856 = vmatmul.mubr.bf16.gmra.mrb[0].mxu0 %v622
  %v857 = vpop.f32.mrb[0].mxu0
  %v858 = vadd.f32 %v661, %v857
  %v859 = vpop.f32.mrb[0].mxu0
  %v860 = vpop.f32.mrb[0].mxu0
  %v861 = vadd.f32 %v661, %v860
  %v862 = vpop.f32.mrb[0].mxu0
  %863 = vmatprep.mubr.bf16.mxu0 0
  %864 = vmatmul.mubr.bf16.gmra.mrb[0].mxu0 %v623
  %v865 = vpop.f32.mrb[0].mxu0
  %v866 = vadd.f32 %v661, %v865
  %v867 = vpop.f32.mrb[0].mxu0
  %v868 = vpop.f32.mrb[0].mxu0
  %v869 = vadd.f32 %v661, %v868
  %v870 = vpop.f32.mrb[0].mxu0
  %871 = vmatprep.mubr.bf16.mxu0 0
  %872 = vmatmul.mubr.bf16.gmra.mrb[0].mxu0 %v624
  %v873 = vpop.f32.mrb[0].mxu0
  %v874 = vadd.f32 %v661, %v873
  %v875 = vpop.f32.mrb[0].mxu0
  %v876 = vpop.f32.mrb[0].mxu0
  %v877 = vadd.f32 %v661, %v876
  %v878 = vpop.f32.mrb[0].mxu0
  %879 = vmatprep.mubr.bf16.mxu0 0
  %880 = vmatmul.mubr.bf16.gmra.mrb[0].mxu0 %v625
  %v881 = vpop.f32.mrb[0].mxu0
  %v882 = vadd.f32 %v661, %v881
  %v883 = vpop.f32.mrb[0].mxu0
  %v884 = vpop.f32.mrb[0].mxu0
  %v885 = vadd.f32 %v661, %v884
  %v886 = vpop.f32.mrb[0].mxu0
  %887 = vmatprep.mubr.bf16.mxu0 0
  %888 = vmatmul.mubr.bf16.gmra.mrb[0].mxu0 %v626
  %v889 = vpop.f32.mrb[0].mxu0
  %v890 = vadd.f32 %v661, %v889
  %v891 = vpop.f32.mrb[0].mxu0
  %v892 = vpop.f32.mrb[0].mxu0
  %v893 = vadd.f32 %v661, %v892
  %v894 = vpop.f32.mrb[0].mxu0
  %895 = vmatprep.mubr.bf16.mxu0 0
  %896 = vmatmul.mubr.bf16.gmra.mrb[0].mxu0 %v627
  %v897 = vpop.f32.mrb[0].mxu0
  %v898 = vadd.f32 %v661, %v897
  %v899 = vpop.f32.mrb[0].mxu0
  %v900 = vpop.f32.mrb[0].mxu0
  %v901 = vadd.f32 %v661, %v900
  %v902 = vpop.f32.mrb[0].mxu0
  %903 = vmatprep.mubr.bf16.mxu0 0
  %904 = vmatmul.mubr.bf16.gmra.mrb[0].mxu0 %v628
  %v905 = vpop.f32.mrb[0].mxu0
  %v906 = vadd.f32 %v661, %v905
  %v907 = vpop.f32.mrb[0].mxu0
  %v908 = vpop.f32.mrb[0].mxu0
  %v909 = vadd.f32 %v661, %v908
  %v910 = vpop.f32.mrb[0].mxu0
  %911 = vmatprep.mubr.bf16.mxu0 0
  %912 = vmatmul.mubr.bf16.gmra.mrb[0].mxu0 %v629
  %v913 = vpop.f32.mrb[0].mxu0
  %v914 = vadd.f32 %v661, %v913
  %v915 = vpop.f32.mrb[0].mxu0
  %v916 = vpop.f32.mrb[0].mxu0
  %v917 = vadd.f32 %v661, %v916
  %v918 = vpop.f32.mrb[0].mxu0
  %919 = vmatprep.mubr.bf16.mxu0 0
  %920 = vmatmul.mubr.bf16.gmra.mrb[0].mxu0 %v630
  %v921 = vpop.f32.mrb[0].mxu0
  %v922 = vadd.f32 %v661, %v921
  %v923 = vpop.f32.mrb[0].mxu0
  %v924 = vpop.f32.mrb[0].mxu0
  %v925 = vadd.f32 %v661, %v924
  %v926 = vpop.f32.mrb[0].mxu0
  %927 = vmatprep.mubr.bf16.mxu0 0
  %928 = vmatmul.mubr.bf16.gmra.mrb[0].mxu0 %v631
  %v929 = vpop.f32.mrb[0].mxu0
  %v930 = vadd.f32 %v661, %v929
  %v931 = vpop.f32.mrb[0].mxu0
  %v932 = vpop.f32.mrb[0].mxu0
  %v933 = vadd.f32 %v661, %v932
  %v934 = vpop.f32.mrb[0].mxu0
  %935 = vmatprep.mubr.bf16.mxu0 0
  %936 = vmatmul.mubr.bf16.gmra.mrb[0].mxu0 %v632
  %v937 = vpop.f32.mrb[0].mxu0
  %v938 = vadd.f32 %v661, %v937
  %v939 = vpop.f32.mrb[0].mxu0
  %v940 = vpop.f32.mrb[0].mxu0
  %v941 = vadd.f32 %v661, %v940
  %v942 = vpop.f32.mrb[0].mxu0
  %943 = vmatprep.mubr.bf16.mxu0 0
  %944 = vmatmul.mubr.bf16.gmra.mrb[0].mxu0 %v633
  %v945 = vpop.f32.mrb[0].mxu0
  %v946 = vadd.f32 %v661, %v945
  %v947 = vpop.f32.mrb[0].mxu0
  %v948 = vpop.f32.mrb[0].mxu0
  %v949 = vadd.f32 %v661, %v948
  %v950 = vpop.f32.mrb[0].mxu0
  %951 = vmatprep.mubr.bf16.mxu0 0
  %952 = vmatmul.mubr.bf16.gmra.mrb[0].mxu0 %v634
  %v953 = vpop.f32.mrb[0].mxu0
  %v954 = vadd.f32 %v661, %v953
  %v955 = vpop.f32.mrb[0].mxu0
  %v956 = vpop.f32.mrb[0].mxu0
  %v957 = vadd.f32 %v661, %v956
  %v958 = vpop.f32.mrb[0].mxu0
  %959 = vmatprep.mubr.bf16.mxu0 0
  %960 = vmatmul.mubr.bf16.gmra.mrb[0].mxu0 %v635
  %v961 = vpop.f32.mrb[0].mxu0
  %v962 = vadd.f32 %v661, %v961
  %v963 = vpop.f32.mrb[0].mxu0
  %v964 = vpop.f32.mrb[0].mxu0
  %v965 = vadd.f32 %v661, %v964
  %v966 = vpop.f32.mrb[0].mxu0
  %967 = vmatprep.mubr.bf16.mxu0 0
  %968 = vmatmul.mubr.bf16.gmra.mrb[0].mxu0 %v636
  %v969 = vpop.f32.mrb[0].mxu0
  %v970 = vadd.f32 %v661, %v969
  %v971 = vpop.f32.mrb[0].mxu0
  %v972 = vpop.f32.mrb[0].mxu0
  %v973 = vadd.f32 %v661, %v972
  %v974 = vpop.f32.mrb[0].mxu0
  %975 = vmatprep.mubr.bf16.mxu0 0
  %976 = vmatmul.mubr.bf16.gmra.mrb[0].mxu0 %v637
  %v977 = vpop.f32.mrb[0].mxu0
  %v978 = vadd.f32 %v661, %v977
  %v979 = vpop.f32.mrb[0].mxu0
  %v980 = vpop.f32.mrb[0].mxu0
  %v981 = vadd.f32 %v661, %v980
  %v982 = vpop.f32.mrb[0].mxu0
  %983 = vmatprep.mubr.bf16.mxu0 0
  %984 = vmatmul.mubr.bf16.gmra.mrb[0].mxu0 %v638
  %v985 = vpop.f32.mrb[0].mxu0
  %v986 = vadd.f32 %v661, %v985
  %v987 = vpop.f32.mrb[0].mxu0
  %v988 = vpop.f32.mrb[0].mxu0
  %v989 = vadd.f32 %v661, %v988
  %v990 = vpop.f32.mrb[0].mxu0
  %991 = vmatprep.mubr.bf16.mxu0 0
  %992 = vmatmul.mubr.bf16.gmra.mrb[0].mxu0 %v639
  %v993 = vpop.f32.mrb[0].mxu0
  %v994 = vadd.f32 %v661, %v993
  %v995 = vpop.f32.mrb[0].mxu0
  %v996 = vpop.f32.mrb[0].mxu0
  %v997 = vadd.f32 %v661, %v996
  %v998 = vpop.f32.mrb[0].mxu0
  %999 = vdwg.mxu0
  %v1000 = vmax.f32 %v746, 0.0
  %v1001 = vmax.f32 %v749, 0.0
  %v1002 = vmax.f32 %v754, 0.0
  %v1003 = vmax.f32 %v757, 0.0
  %v1004 = vmax.f32 %v762, 0.0
  %v1005 = vmax.f32 %v765, 0.0
  %v1006 = vmax.f32 %v770, 0.0
  %v1007 = vmax.f32 %v773, 0.0
  %v1008 = vmax.f32 %v778, 0.0
  %v1009 = vmax.f32 %v781, 0.0
  %v1010 = vmax.f32 %v786, 0.0
  %v1011 = vmax.f32 %v789, 0.0
  %v1012 = vmax.f32 %v794, 0.0
  %v1013 = vmax.f32 %v797, 0.0
  %v1014 = vmax.f32 %v802, 0.0
  %v1015 = vmax.f32 %v805, 0.0
  %v1016 = vmax.f32 %v810, 0.0
  %v1017 = vmax.f32 %v813, 0.0
  %v1018 = vmax.f32 %v818, 0.0
  %v1019 = vmax.f32 %v821, 0.0
  %v1020 = vmax.f32 %v826, 0.0
  %v1021 = vmax.f32 %v829, 0.0
  %v1022 = vmax.f32 %v834, 0.0
  %v1023 = vmax.f32 %v837, 0.0
  %v1024 = vmax.f32 %v842, 0.0
  %v1025 = vmax.f32 %v845, 0.0
  %v1026 = vmax.f32 %v850, 0.0
  %v1027 = vmax.f32 %v853, 0.0
  %v1028 = vmax.f32 %v858, 0.0
  %v1029 = vmax.f32 %v861, 0.0
  %v1030 = vmax.f32 %v866, 0.0
  %v1031 = vmax.f32 %v869, 0.0
  %v1032 = vmax.f32 %v874, 0.0
  %v1033 = vmax.f32 %v877, 0.0
  %v1034 = vmax.f32 %v882, 0.0
  %v1035 = vmax.f32 %v885, 0.0
  %v1036 = vmax.f32 %v890, 0.0
  %v1037 = vmax.f32 %v893, 0.0
  %v1038 = vmax.f32 %v898, 0.0
  %v1039 = vmax.f32 %v901, 0.0
  %v1040 = vmax.f32 %v906, 0.0
  %v1041 = vmax.f32 %v909, 0.0
  %v1042 = vmax.f32 %v914, 0.0
  %v1043 = vmax.f32 %v917, 0.0
  %v1044 = vmax.f32 %v922, 0.0
  %v1045 = vmax.f32 %v925, 0.0
  %v1046 = vmax.f32 %v930, 0.0
  %v1047 = vmax.f32 %v933, 0.0
  %v1048 = vmax.f32 %v938, 0.0
  %v1049 = vmax.f32 %v941, 0.0
  %v1050 = vmax.f32 %v946, 0.0
  %v1051 = vmax.f32 %v949, 0.0
  %v1052 = vmax.f32 %v954, 0.0
  %v1053 = vmax.f32 %v957, 0.0
  %v1054 = vmax.f32 %v962, 0.0
  %v1055 = vmax.f32 %v965, 0.0
  %v1056 = vmax.f32 %v970, 0.0
  %v1057 = vmax.f32 %v973, 0.0
  %v1058 = vmax.f32 %v978, 0.0
  %v1059 = vmax.f32 %v981, 0.0
  %v1060 = vmax.f32 %v986, 0.0
  %v1061 = vmax.f32 %v989, 0.0
  %v1062 = vmax.f32 %v994, 0.0
  %v1063 = vmax.f32 %v997, 0.0
  %v1064 = vpack.c.bf16 %v1001, %v1000
  %v1065 = vpack.c.bf16 %v1003, %v1002
  %v1066 = vpack.c.bf16 %v1005, %v1004
  %v1067 = vpack.c.bf16 %v1007, %v1006
  %v1068 = vpack.c.bf16 %v1009, %v1008
  %v1069 = vpack.c.bf16 %v1011, %v1010
  %v1070 = vpack.c.bf16 %v1013, %v1012
  %v1071 = vpack.c.bf16 %v1015, %v1014
  %v1072 = vpack.c.bf16 %v1017, %v1016
  %v1073 = vpack.c.bf16 %v1019, %v1018
  %v1074 = vpack.c.bf16 %v1021, %v1020
  %v1075 = vpack.c.bf16 %v1023, %v1022
  %v1076 = vpack.c.bf16 %v1025, %v1024
  %v1077 = vpack.c.bf16 %v1027, %v1026
  %v1078 = vpack.c.bf16 %v1029, %v1028
  %v1079 = vpack.c.bf16 %v1031, %v1030
  %v1080 = vpack.c.bf16 %v1033, %v1032
  %v1081 = vpack.c.bf16 %v1035, %v1034
  %v1082 = vpack.c.bf16 %v1037, %v1036
  %v1083 = vpack.c.bf16 %v1039, %v1038
  %v1084 = vpack.c.bf16 %v1041, %v1040
  %v1085 = vpack.c.bf16 %v1043, %v1042
  %v1086 = vpack.c.bf16 %v1045, %v1044
  %v1087 = vpack.c.bf16 %v1047, %v1046
  %v1088 = vpack.c.bf16 %v1049, %v1048
  %v1089 = vpack.c.bf16 %v1051, %v1050
  %v1090 = vpack.c.bf16 %v1053, %v1052
  %v1091 = vpack.c.bf16 %v1055, %v1054
  %v1092 = vpack.c.bf16 %v1057, %v1056
  %v1093 = vpack.c.bf16 %v1059, %v1058
  %v1094 = vpack.c.bf16 %v1061, %v1060
  %v1095 = vpack.c.bf16 %v1063, %v1062
  %v1096 = vld [vmem:[%s3] sm:$0xf]
  %v1097 = vld [vmem:[%s3 + $0x4] sm:$0xf]
  %v1098 = vld [vmem:[%s3 + $0x8] sm:$0xf]
  %v1099 = vld [vmem:[%s3 + $0xc] sm:$0xf]
  %v1100 = vld [vmem:[%s3 + $0x10] sm:$0xf]
  %v1101 = vld [vmem:[%s3 + $0x14] sm:$0xf]
  %v1102 = vld [vmem:[%s3 + $0x18] sm:$0xf]
  %v1103 = vld [vmem:[%s3 + $0x1c] sm:$0xf]
  %v1104 = vld [vmem:[%s8] sm:$0x1]
  %v1106 = vlaneseq
  %v1107 = vshrl.u32 %v1106, 7
  %v1108 = vsub.s32 0, %v1107
  %v1109 = vrot.slane %v1104, %v1108
  %v1119 = vunpack.c.l.b16 %v1096
  %v1120 = vunpack.c.l.b16 %v1097
  %v1121 = vunpack.c.l.b16 %v1098
  %v1122 = vunpack.c.l.b16 %v1099
  %v1123 = vunpack.c.l.b16 %v1100
  %v1124 = vunpack.c.l.b16 %v1101
  %v1125 = vunpack.c.l.b16 %v1102
  %v1126 = vunpack.c.l.b16 %v1103
  %v1127 = vpack.c.b16 %v1120, %v1119
  %v1128 = vpack.c.b16 %v1122, %v1121
  %v1129 = vpack.c.b16 %v1124, %v1123
  %v1130 = vpack.c.b16 %v1126, %v1125
  %vm1135 = vcmask 523264
  %v1137 = vsel %vm1135, %v1064, 0
  %v1140 = vsel %vm1135, %v1065, 0
  %v1143 = vsel %vm1135, %v1066, 0
  %v1146 = vsel %vm1135, %v1067, 0
  %v1149 = vsel %vm1135, %v1068, 0
  %v1152 = vsel %vm1135, %v1069, 0
  %v1155 = vsel %vm1135, %v1070, 0
  %v1158 = vsel %vm1135, %v1071, 0
  %v1161 = vsel %vm1135, %v1072, 0
  %v1164 = vsel %vm1135, %v1073, 0
  %v1167 = vsel %vm1135, %v1074, 0
  %v1170 = vsel %vm1135, %v1075, 0
  %v1173 = vsel %vm1135, %v1076, 0
  %v1176 = vsel %vm1135, %v1077, 0
  %v1179 = vsel %vm1135, %v1078, 0
  %v1182 = vsel %vm1135, %v1079, 0
  %v1185 = vsel %vm1135, %v1080, 0
  %v1188 = vsel %vm1135, %v1081, 0
  %v1191 = vsel %vm1135, %v1082, 0
  %v1194 = vsel %vm1135, %v1083, 0
  %v1197 = vsel %vm1135, %v1084, 0
  %v1200 = vsel %vm1135, %v1085, 0
  %v1203 = vsel %vm1135, %v1086, 0
  %v1206 = vsel %vm1135, %v1087, 0
  %v1209 = vsel %vm1135, %v1088, 0
  %v1212 = vsel %vm1135, %v1089, 0
  %v1215 = vsel %vm1135, %v1090, 0
  %v1218 = vsel %vm1135, %v1091, 0
  %v1221 = vsel %vm1135, %v1092, 0
  %v1224 = vsel %vm1135, %v1093, 0
  %v1227 = vsel %vm1135, %v1094, 0
  %v1230 = vsel %vm1135, %v1095, 0
  %1232 = vmatprep.subr.bf16.mxu0 0
  %1233 = vmatpush1.bf16.msra.mxu0 %v1127
  %1234 = vmatprep.subr.bf16.mxu0 0
  %1235 = vmatpush1.bf16.msra.mxu0 %v1128
  %1236 = vmatprep.subr.bf16.mxu0 0
  %1237 = vmatpush1.bf16.msra.mxu0 %v1129
  %1238 = vmatprep.subr.bf16.mxu0 0
  %1239 = vmatpush1.bf16.msra.mxu0 %v1130
  %1240 = vmatprep.subr.bf16.mxu0 0
  %1241 = vmatpush1.bf16.msra.mxu0 0
  %1242 = vmatprep.subr.bf16.mxu0 0
  %1243 = vmatpush1.bf16.msra.mxu0 0
  %1244 = vmatprep.subr.bf16.mxu0 0
  %1245 = vmatpush1.bf16.msra.mxu0 0
  %1246 = vmatprep.subr.bf16.mxu0 0
  %1247 = vmatpush1.bf16.msra.mxu0 0
  %1248 = vmatprep.subr.bf16.mxu0 0
  %1249 = vmatpush1.bf16.msra.mxu0 0
  %1250 = vmatprep.subr.bf16.mxu0 0
  %1251 = vmatpush1.bf16.msra.mxu0 0
  %1252 = vmatprep.subr.bf16.mxu0 0
  %1253 = vmatpush1.bf16.msra.mxu0 0
  %1254 = vmatprep.subr.bf16.mxu0 0
  %1255 = vmatpush1.bf16.msra.mxu0 0
  %1256 = vmatprep.subr.bf16.mxu0 0
  %1257 = vmatpush1.bf16.msra.mxu0 0
  %1258 = vmatprep.subr.bf16.mxu0 0
  %1259 = vmatpush1.bf16.msra.mxu0 0
  %1260 = vmatprep.subr.bf16.mxu0 0
  %1261 = vmatpush1.bf16.msra.mxu0 0
  %1262 = vmatprep.subr.bf16.mxu0 0
  %1263 = vmatpush1.bf16.msra.mxu0 0
  %1264 = vmatprep.mubr.bf16.mxu0 0
  %1265 = vmatmul.mubr.bf16.gmra.mrb[0].mxu0 %v1137
  %v1266 = vpop.f32.mrb[0].mxu0
  %v1267 = vadd.f32 %v1109, %v1266
  %v1268 = vpop.f32.mrb[0].mxu0
  %v1269 = vpop.f32.mrb[0].mxu0
  %v1270 = vadd.f32 %v1109, %v1269
  %v1271 = vpop.f32.mrb[0].mxu0
  %1272 = vmatprep.mubr.bf16.mxu0 0
  %1273 = vmatmul.mubr.bf16.gmra.mrb[0].mxu0 %v1140
  %v1274 = vpop.f32.mrb[0].mxu0
  %v1275 = vadd.f32 %v1109, %v1274
  %v1276 = vpop.f32.mrb[0].mxu0
  %v1277 = vpop.f32.mrb[0].mxu0
  %v1278 = vadd.f32 %v1109, %v1277
  %v1279 = vpop.f32.mrb[0].mxu0
  %1280 = vmatprep.mubr.bf16.mxu0 0
  %1281 = vmatmul.mubr.bf16.gmra.mrb[0].mxu0 %v1143
  %v1282 = vpop.f32.mrb[0].mxu0
  %v1283 = vadd.f32 %v1109, %v1282
  %v1284 = vpop.f32.mrb[0].mxu0
  %v1285 = vpop.f32.mrb[0].mxu0
  %v1286 = vadd.f32 %v1109, %v1285
  %v1287 = vpop.f32.mrb[0].mxu0
  %1288 = vmatprep.mubr.bf16.mxu0 0
  %1289 = vmatmul.mubr.bf16.gmra.mrb[0].mxu0 %v1146
  %v1290 = vpop.f32.mrb[0].mxu0
  %v1291 = vadd.f32 %v1109, %v1290
  %v1292 = vpop.f32.mrb[0].mxu0
  %v1293 = vpop.f32.mrb[0].mxu0
  %v1294 = vadd.f32 %v1109, %v1293
  %v1295 = vpop.f32.mrb[0].mxu0
  %1296 = vmatprep.mubr.bf16.mxu0 0
  %1297 = vmatmul.mubr.bf16.gmra.mrb[0].mxu0 %v1149
  %v1298 = vpop.f32.mrb[0].mxu0
  %v1299 = vadd.f32 %v1109, %v1298
  %v1300 = vpop.f32.mrb[0].mxu0
  %v1301 = vpop.f32.mrb[0].mxu0
  %v1302 = vadd.f32 %v1109, %v1301
  %v1303 = vpop.f32.mrb[0].mxu0
  %1304 = vmatprep.mubr.bf16.mxu0 0
  %1305 = vmatmul.mubr.bf16.gmra.mrb[0].mxu0 %v1152
  %v1306 = vpop.f32.mrb[0].mxu0
  %v1307 = vadd.f32 %v1109, %v1306
  %v1308 = vpop.f32.mrb[0].mxu0
  %v1309 = vpop.f32.mrb[0].mxu0
  %v1310 = vadd.f32 %v1109, %v1309
  %v1311 = vpop.f32.mrb[0].mxu0
  %1312 = vmatprep.mubr.bf16.mxu0 0
  %1313 = vmatmul.mubr.bf16.gmra.mrb[0].mxu0 %v1155
  %v1314 = vpop.f32.mrb[0].mxu0
  %v1315 = vadd.f32 %v1109, %v1314
  %v1316 = vpop.f32.mrb[0].mxu0
  %v1317 = vpop.f32.mrb[0].mxu0
  %v1318 = vadd.f32 %v1109, %v1317
  %v1319 = vpop.f32.mrb[0].mxu0
  %1320 = vmatprep.mubr.bf16.mxu0 0
  %1321 = vmatmul.mubr.bf16.gmra.mrb[0].mxu0 %v1158
  %v1322 = vpop.f32.mrb[0].mxu0
  %v1323 = vadd.f32 %v1109, %v1322
  %v1324 = vpop.f32.mrb[0].mxu0
  %v1325 = vpop.f32.mrb[0].mxu0
  %v1326 = vadd.f32 %v1109, %v1325
  %v1327 = vpop.f32.mrb[0].mxu0
  %1328 = vmatprep.mubr.bf16.mxu0 0
  %1329 = vmatmul.mubr.bf16.gmra.mrb[0].mxu0 %v1161
  %v1330 = vpop.f32.mrb[0].mxu0
  %v1331 = vadd.f32 %v1109, %v1330
  %v1332 = vpop.f32.mrb[0].mxu0
  %v1333 = vpop.f32.mrb[0].mxu0
  %v1334 = vadd.f32 %v1109, %v1333
  %v1335 = vpop.f32.mrb[0].mxu0
  %1336 = vmatprep.mubr.bf16.mxu0 0
  %1337 = vmatmul.mubr.bf16.gmra.mrb[0].mxu0 %v1164
  %v1338 = vpop.f32.mrb[0].mxu0
  %v1339 = vadd.f32 %v1109, %v1338
  %v1340 = vpop.f32.mrb[0].mxu0
  %v1341 = vpop.f32.mrb[0].mxu0
  %v1342 = vadd.f32 %v1109, %v1341
  %v1343 = vpop.f32.mrb[0].mxu0
  %1344 = vmatprep.mubr.bf16.mxu0 0
  %1345 = vmatmul.mubr.bf16.gmra.mrb[0].mxu0 %v1167
  %v1346 = vpop.f32.mrb[0].mxu0
  %v1347 = vadd.f32 %v1109, %v1346
  %v1348 = vpop.f32.mrb[0].mxu0
  %v1349 = vpop.f32.mrb[0].mxu0
  %v1350 = vadd.f32 %v1109, %v1349
  %v1351 = vpop.f32.mrb[0].mxu0
  %1352 = vmatprep.mubr.bf16.mxu0 0
  %1353 = vmatmul.mubr.bf16.gmra.mrb[0].mxu0 %v1170
  %v1354 = vpop.f32.mrb[0].mxu0
  %v1355 = vadd.f32 %v1109, %v1354
  %v1356 = vpop.f32.mrb[0].mxu0
  %v1357 = vpop.f32.mrb[0].mxu0
  %v1358 = vadd.f32 %v1109, %v1357
  %v1359 = vpop.f32.mrb[0].mxu0
  %1360 = vmatprep.mubr.bf16.mxu0 0
  %1361 = vmatmul.mubr.bf16.gmra.mrb[0].mxu0 %v1173
  %v1362 = vpop.f32.mrb[0].mxu0
  %v1363 = vadd.f32 %v1109, %v1362
  %v1364 = vpop.f32.mrb[0].mxu0
  %v1365 = vpop.f32.mrb[0].mxu0
  %v1366 = vadd.f32 %v1109, %v1365
  %v1367 = vpop.f32.mrb[0].mxu0
  %1368 = vmatprep.mubr.bf16.mxu0 0
  %1369 = vmatmul.mubr.bf16.gmra.mrb[0].mxu0 %v1176
  %v1370 = vpop.f32.mrb[0].mxu0
  %v1371 = vadd.f32 %v1109, %v1370
  %v1372 = vpop.f32.mrb[0].mxu0
  %v1373 = vpop.f32.mrb[0].mxu0
  %v1374 = vadd.f32 %v1109, %v1373
  %v1375 = vpop.f32.mrb[0].mxu0
  %1376 = vmatprep.mubr.bf16.mxu0 0
  %1377 = vmatmul.mubr.bf16.gmra.mrb[0].mxu0 %v1179
  %v1378 = vpop.f32.mrb[0].mxu0
  %v1379 = vadd.f32 %v1109, %v1378
  %v1380 = vpop.f32.mrb[0].mxu0
  %v1381 = vpop.f32.mrb[0].mxu0
  %v1382 = vadd.f32 %v1109, %v1381
  %v1383 = vpop.f32.mrb[0].mxu0
  %1384 = vmatprep.mubr.bf16.mxu0 0
  %1385 = vmatmul.mubr.bf16.gmra.mrb[0].mxu0 %v1182
  %v1386 = vpop.f32.mrb[0].mxu0
  %v1387 = vadd.f32 %v1109, %v1386
  %v1388 = vpop.f32.mrb[0].mxu0
  %v1389 = vpop.f32.mrb[0].mxu0
  %v1390 = vadd.f32 %v1109, %v1389
  %v1391 = vpop.f32.mrb[0].mxu0
  %1392 = vmatprep.mubr.bf16.mxu0 0
  %1393 = vmatmul.mubr.bf16.gmra.mrb[0].mxu0 %v1185
  %v1394 = vpop.f32.mrb[0].mxu0
  %v1395 = vadd.f32 %v1109, %v1394
  %v1396 = vpop.f32.mrb[0].mxu0
  %v1397 = vpop.f32.mrb[0].mxu0
  %v1398 = vadd.f32 %v1109, %v1397
  %v1399 = vpop.f32.mrb[0].mxu0
  %1400 = vmatprep.mubr.bf16.mxu0 0
  %1401 = vmatmul.mubr.bf16.gmra.mrb[0].mxu0 %v1188
  %v1402 = vpop.f32.mrb[0].mxu0
  %v1403 = vadd.f32 %v1109, %v1402
  %v1404 = vpop.f32.mrb[0].mxu0
  %v1405 = vpop.f32.mrb[0].mxu0
  %v1406 = vadd.f32 %v1109, %v1405
  %v1407 = vpop.f32.mrb[0].mxu0
  %1408 = vmatprep.mubr.bf16.mxu0 0
  %1409 = vmatmul.mubr.bf16.gmra.mrb[0].mxu0 %v1191
  %v1410 = vpop.f32.mrb[0].mxu0
  %v1411 = vadd.f32 %v1109, %v1410
  %v1412 = vpop.f32.mrb[0].mxu0
  %v1413 = vpop.f32.mrb[0].mxu0
  %v1414 = vadd.f32 %v1109, %v1413
  %v1415 = vpop.f32.mrb[0].mxu0
  %1416 = vmatprep.mubr.bf16.mxu0 0
  %1417 = vmatmul.mubr.bf16.gmra.mrb[0].mxu0 %v1194
  %v1418 = vpop.f32.mrb[0].mxu0
  %v1419 = vadd.f32 %v1109, %v1418
  %v1420 = vpop.f32.mrb[0].mxu0
  %v1421 = vpop.f32.mrb[0].mxu0
  %v1422 = vadd.f32 %v1109, %v1421
  %v1423 = vpop.f32.mrb[0].mxu0
  %1424 = vmatprep.mubr.bf16.mxu0 0
  %1425 = vmatmul.mubr.bf16.gmra.mrb[0].mxu0 %v1197
  %v1426 = vpop.f32.mrb[0].mxu0
  %v1427 = vadd.f32 %v1109, %v1426
  %v1428 = vpop.f32.mrb[0].mxu0
  %v1429 = vpop.f32.mrb[0].mxu0
  %v1430 = vadd.f32 %v1109, %v1429
  %v1431 = vpop.f32.mrb[0].mxu0
  %1432 = vmatprep.mubr.bf16.mxu0 0
  %1433 = vmatmul.mubr.bf16.gmra.mrb[0].mxu0 %v1200
  %v1434 = vpop.f32.mrb[0].mxu0
  %v1435 = vadd.f32 %v1109, %v1434
  %v1436 = vpop.f32.mrb[0].mxu0
  %v1437 = vpop.f32.mrb[0].mxu0
  %v1438 = vadd.f32 %v1109, %v1437
  %v1439 = vpop.f32.mrb[0].mxu0
  %1440 = vmatprep.mubr.bf16.mxu0 0
  %1441 = vmatmul.mubr.bf16.gmra.mrb[0].mxu0 %v1203
  %v1442 = vpop.f32.mrb[0].mxu0
  %v1443 = vadd.f32 %v1109, %v1442
  %v1444 = vpop.f32.mrb[0].mxu0
  %v1445 = vpop.f32.mrb[0].mxu0
  %v1446 = vadd.f32 %v1109, %v1445
  %v1447 = vpop.f32.mrb[0].mxu0
  %1448 = vmatprep.mubr.bf16.mxu0 0
  %1449 = vmatmul.mubr.bf16.gmra.mrb[0].mxu0 %v1206
  %v1450 = vpop.f32.mrb[0].mxu0
  %v1451 = vadd.f32 %v1109, %v1450
  %v1452 = vpop.f32.mrb[0].mxu0
  %v1453 = vpop.f32.mrb[0].mxu0
  %v1454 = vadd.f32 %v1109, %v1453
  %v1455 = vpop.f32.mrb[0].mxu0
  %1456 = vmatprep.mubr.bf16.mxu0 0
  %1457 = vmatmul.mubr.bf16.gmra.mrb[0].mxu0 %v1209
  %v1458 = vpop.f32.mrb[0].mxu0
  %v1459 = vadd.f32 %v1109, %v1458
  %v1460 = vpop.f32.mrb[0].mxu0
  %v1461 = vpop.f32.mrb[0].mxu0
  %v1462 = vadd.f32 %v1109, %v1461
  %v1463 = vpop.f32.mrb[0].mxu0
  %1464 = vmatprep.mubr.bf16.mxu0 0
  %1465 = vmatmul.mubr.bf16.gmra.mrb[0].mxu0 %v1212
  %v1466 = vpop.f32.mrb[0].mxu0
  %v1467 = vadd.f32 %v1109, %v1466
  %v1468 = vpop.f32.mrb[0].mxu0
  %v1469 = vpop.f32.mrb[0].mxu0
  %v1470 = vadd.f32 %v1109, %v1469
  %v1471 = vpop.f32.mrb[0].mxu0
  %1472 = vmatprep.mubr.bf16.mxu0 0
  %1473 = vmatmul.mubr.bf16.gmra.mrb[0].mxu0 %v1215
  %v1474 = vpop.f32.mrb[0].mxu0
  %v1475 = vadd.f32 %v1109, %v1474
  %v1476 = vpop.f32.mrb[0].mxu0
  %v1477 = vpop.f32.mrb[0].mxu0
  %v1478 = vadd.f32 %v1109, %v1477
  %v1479 = vpop.f32.mrb[0].mxu0
  %1480 = vmatprep.mubr.bf16.mxu0 0
  %1481 = vmatmul.mubr.bf16.gmra.mrb[0].mxu0 %v1218
  %v1482 = vpop.f32.mrb[0].mxu0
  %v1483 = vadd.f32 %v1109, %v1482
  %v1484 = vpop.f32.mrb[0].mxu0
  %v1485 = vpop.f32.mrb[0].mxu0
  %v1486 = vadd.f32 %v1109, %v1485
  %v1487 = vpop.f32.mrb[0].mxu0
  %1488 = vmatprep.mubr.bf16.mxu0 0
  %1489 = vmatmul.mubr.bf16.gmra.mrb[0].mxu0 %v1221
  %v1490 = vpop.f32.mrb[0].mxu0
  %v1491 = vadd.f32 %v1109, %v1490
  %v1492 = vpop.f32.mrb[0].mxu0
  %v1493 = vpop.f32.mrb[0].mxu0
  %v1494 = vadd.f32 %v1109, %v1493
  %v1495 = vpop.f32.mrb[0].mxu0
  %1496 = vmatprep.mubr.bf16.mxu0 0
  %1497 = vmatmul.mubr.bf16.gmra.mrb[0].mxu0 %v1224
  %v1498 = vpop.f32.mrb[0].mxu0
  %v1499 = vadd.f32 %v1109, %v1498
  %v1500 = vpop.f32.mrb[0].mxu0
  %v1501 = vpop.f32.mrb[0].mxu0
  %v1502 = vadd.f32 %v1109, %v1501
  %v1503 = vpop.f32.mrb[0].mxu0
  %1504 = vmatprep.mubr.bf16.mxu0 0
  %1505 = vmatmul.mubr.bf16.gmra.mrb[0].mxu0 %v1227
  %v1506 = vpop.f32.mrb[0].mxu0
  %v1507 = vadd.f32 %v1109, %v1506
  %v1508 = vpop.f32.mrb[0].mxu0
  %v1509 = vpop.f32.mrb[0].mxu0
  %v1510 = vadd.f32 %v1109, %v1509
  %v1511 = vpop.f32.mrb[0].mxu0
  %1512 = vmatprep.mubr.bf16.mxu0 0
  %1513 = vmatmul.mubr.bf16.gmra.mrb[0].mxu0 %v1230
  %v1514 = vpop.f32.mrb[0].mxu0
  %v1515 = vadd.f32 %v1109, %v1514
  %v1516 = vpop.f32.mrb[0].mxu0
  %v1517 = vpop.f32.mrb[0].mxu0
  %v1518 = vadd.f32 %v1109, %v1517
  %v1519 = vpop.f32.mrb[0].mxu0
  %1520 = vdwg.mxu0
  %v1521 = vmax.f32 %v1267, 0.0
  %v1522 = vmax.f32 %v1270, 0.0
  %v1523 = vmax.f32 %v1275, 0.0
  %v1524 = vmax.f32 %v1278, 0.0
  %v1525 = vmax.f32 %v1283, 0.0
  %v1526 = vmax.f32 %v1286, 0.0
  %v1527 = vmax.f32 %v1291, 0.0
  %v1528 = vmax.f32 %v1294, 0.0
  %v1529 = vmax.f32 %v1299, 0.0
  %v1530 = vmax.f32 %v1302, 0.0
  %v1531 = vmax.f32 %v1307, 0.0
  %v1532 = vmax.f32 %v1310, 0.0
  %v1533 = vmax.f32 %v1315, 0.0
  %v1534 = vmax.f32 %v1318, 0.0
  %v1535 = vmax.f32 %v1323, 0.0
  %v1536 = vmax.f32 %v1326, 0.0
  %v1537 = vmax.f32 %v1331, 0.0
  %v1538 = vmax.f32 %v1334, 0.0
  %v1539 = vmax.f32 %v1339, 0.0
  %v1540 = vmax.f32 %v1342, 0.0
  %v1541 = vmax.f32 %v1347, 0.0
  %v1542 = vmax.f32 %v1350, 0.0
  %v1543 = vmax.f32 %v1355, 0.0
  %v1544 = vmax.f32 %v1358, 0.0
  %v1545 = vmax.f32 %v1363, 0.0
  %v1546 = vmax.f32 %v1366, 0.0
  %v1547 = vmax.f32 %v1371, 0.0
  %v1548 = vmax.f32 %v1374, 0.0
  %v1549 = vmax.f32 %v1379, 0.0
  %v1550 = vmax.f32 %v1382, 0.0
  %v1551 = vmax.f32 %v1387, 0.0
  %v1552 = vmax.f32 %v1390, 0.0
  %v1553 = vmax.f32 %v1395, 0.0
  %v1554 = vmax.f32 %v1398, 0.0
  %v1555 = vmax.f32 %v1403, 0.0
  %v1556 = vmax.f32 %v1406, 0.0
  %v1557 = vmax.f32 %v1411, 0.0
  %v1558 = vmax.f32 %v1414, 0.0
  %v1559 = vmax.f32 %v1419, 0.0
  %v1560 = vmax.f32 %v1422, 0.0
  %v1561 = vmax.f32 %v1427, 0.0
  %v1562 = vmax.f32 %v1430, 0.0
  %v1563 = vmax.f32 %v1435, 0.0
  %v1564 = vmax.f32 %v1438, 0.0
  %v1565 = vmax.f32 %v1443, 0.0
  %v1566 = vmax.f32 %v1446, 0.0
  %v1567 = vmax.f32 %v1451, 0.0
  %v1568 = vmax.f32 %v1454, 0.0
  %v1569 = vmax.f32 %v1459, 0.0
  %v1570 = vmax.f32 %v1462, 0.0
  %v1571 = vmax.f32 %v1467, 0.0
  %v1572 = vmax.f32 %v1470, 0.0
  %v1573 = vmax.f32 %v1475, 0.0
  %v1574 = vmax.f32 %v1478, 0.0
  %v1575 = vmax.f32 %v1483, 0.0
  %v1576 = vmax.f32 %v1486, 0.0
  %v1577 = vmax.f32 %v1491, 0.0
  %v1578 = vmax.f32 %v1494, 0.0
  %v1579 = vmax.f32 %v1499, 0.0
  %v1580 = vmax.f32 %v1502, 0.0
  %v1581 = vmax.f32 %v1507, 0.0
  %v1582 = vmax.f32 %v1510, 0.0
  %v1583 = vmax.f32 %v1515, 0.0
  %v1584 = vmax.f32 %v1518, 0.0
  %v1585 = vpack.c.bf16 %v1522, %v1521
  %v1586 = vpack.c.bf16 %v1524, %v1523
  %v1587 = vpack.c.bf16 %v1526, %v1525
  %v1588 = vpack.c.bf16 %v1528, %v1527
  %v1589 = vpack.c.bf16 %v1530, %v1529
  %v1590 = vpack.c.bf16 %v1532, %v1531
  %v1591 = vpack.c.bf16 %v1534, %v1533
  %v1592 = vpack.c.bf16 %v1536, %v1535
  %v1593 = vpack.c.bf16 %v1538, %v1537
  %v1594 = vpack.c.bf16 %v1540, %v1539
  %v1595 = vpack.c.bf16 %v1542, %v1541
  %v1596 = vpack.c.bf16 %v1544, %v1543
  %v1597 = vpack.c.bf16 %v1546, %v1545
  %v1598 = vpack.c.bf16 %v1548, %v1547
  %v1599 = vpack.c.bf16 %v1550, %v1549
  %v1600 = vpack.c.bf16 %v1552, %v1551
  %v1601 = vpack.c.bf16 %v1554, %v1553
  %v1602 = vpack.c.bf16 %v1556, %v1555
  %v1603 = vpack.c.bf16 %v1558, %v1557
  %v1604 = vpack.c.bf16 %v1560, %v1559
  %v1605 = vpack.c.bf16 %v1562, %v1561
  %v1606 = vpack.c.bf16 %v1564, %v1563
  %v1607 = vpack.c.bf16 %v1566, %v1565
  %v1608 = vpack.c.bf16 %v1568, %v1567
  %v1609 = vpack.c.bf16 %v1570, %v1569
  %v1610 = vpack.c.bf16 %v1572, %v1571
  %v1611 = vpack.c.bf16 %v1574, %v1573
  %v1612 = vpack.c.bf16 %v1576, %v1575
  %v1613 = vpack.c.bf16 %v1578, %v1577
  %v1614 = vpack.c.bf16 %v1580, %v1579
  %v1615 = vpack.c.bf16 %v1582, %v1581
  %v1616 = vpack.c.bf16 %v1584, %v1583
  %v1617 = vld [vmem:[%s4] sm:$0xf]
  %v1618 = vld [vmem:[%s4 + $0x4] sm:$0xf]
  %v1619 = vld [vmem:[%s4 + $0x8] sm:$0xf]
  %v1620 = vld [vmem:[%s4 + $0xc] sm:$0xf]
  %v1621 = vld [vmem:[%s4 + $0x10] sm:$0xf]
  %v1622 = vld [vmem:[%s4 + $0x14] sm:$0xf]
  %v1623 = vld [vmem:[%s4 + $0x18] sm:$0xf]
  %v1624 = vld [vmem:[%s4 + $0x1c] sm:$0xf]
  %v1625 = vld [vmem:[%s9] sm:$0x1]
  %v1627 = vlaneseq
  %v1628 = vshrl.u32 %v1627, 7
  %v1629 = vsub.s32 0, %v1628
  %v1630 = vrot.slane %v1625, %v1629
  %v1640 = vunpack.c.l.b16 %v1617
  %v1641 = vunpack.c.l.b16 %v1618
  %v1642 = vunpack.c.l.b16 %v1619
  %v1643 = vunpack.c.l.b16 %v1620
  %v1644 = vunpack.c.l.b16 %v1621
  %v1645 = vunpack.c.l.b16 %v1622
  %v1646 = vunpack.c.l.b16 %v1623
  %v1647 = vunpack.c.l.b16 %v1624
  %v1648 = vpack.c.b16 %v1641, %v1640
  %v1649 = vpack.c.b16 %v1643, %v1642
  %v1650 = vpack.c.b16 %v1645, %v1644
  %v1651 = vpack.c.b16 %v1647, %v1646
  %v1657 = vsel %vm1135, %v1585, 0
  %v1660 = vsel %vm1135, %v1586, 0
  %v1663 = vsel %vm1135, %v1587, 0
  %v1666 = vsel %vm1135, %v1588, 0
  %v1669 = vsel %vm1135, %v1589, 0
  %v1672 = vsel %vm1135, %v1590, 0
  %v1675 = vsel %vm1135, %v1591, 0
  %v1678 = vsel %vm1135, %v1592, 0
  %v1681 = vsel %vm1135, %v1593, 0
  %v1684 = vsel %vm1135, %v1594, 0
  %v1687 = vsel %vm1135, %v1595, 0
  %v1690 = vsel %vm1135, %v1596, 0
  %v1693 = vsel %vm1135, %v1597, 0
  %v1696 = vsel %vm1135, %v1598, 0
  %v1699 = vsel %vm1135, %v1599, 0
  %v1702 = vsel %vm1135, %v1600, 0
  %v1705 = vsel %vm1135, %v1601, 0
  %v1708 = vsel %vm1135, %v1602, 0
  %v1711 = vsel %vm1135, %v1603, 0
  %v1714 = vsel %vm1135, %v1604, 0
  %v1717 = vsel %vm1135, %v1605, 0
  %v1720 = vsel %vm1135, %v1606, 0
  %v1723 = vsel %vm1135, %v1607, 0
  %v1726 = vsel %vm1135, %v1608, 0
  %v1729 = vsel %vm1135, %v1609, 0
  %v1732 = vsel %vm1135, %v1610, 0
  %v1735 = vsel %vm1135, %v1611, 0
  %v1738 = vsel %vm1135, %v1612, 0
  %v1741 = vsel %vm1135, %v1613, 0
  %v1744 = vsel %vm1135, %v1614, 0
  %v1747 = vsel %vm1135, %v1615, 0
  %v1750 = vsel %vm1135, %v1616, 0
  %1752 = vmatprep.subr.bf16.mxu0 0
  %1753 = vmatpush1.bf16.msra.mxu0 %v1648
  %1754 = vmatprep.subr.bf16.mxu0 0
  %1755 = vmatpush1.bf16.msra.mxu0 %v1649
  %1756 = vmatprep.subr.bf16.mxu0 0
  %1757 = vmatpush1.bf16.msra.mxu0 %v1650
  %1758 = vmatprep.subr.bf16.mxu0 0
  %1759 = vmatpush1.bf16.msra.mxu0 %v1651
  %1760 = vmatprep.subr.bf16.mxu0 0
  %1761 = vmatpush1.bf16.msra.mxu0 0
  %1762 = vmatprep.subr.bf16.mxu0 0
  %1763 = vmatpush1.bf16.msra.mxu0 0
  %1764 = vmatprep.subr.bf16.mxu0 0
  %1765 = vmatpush1.bf16.msra.mxu0 0
  %1766 = vmatprep.subr.bf16.mxu0 0
  %1767 = vmatpush1.bf16.msra.mxu0 0
  %1768 = vmatprep.subr.bf16.mxu0 0
  %1769 = vmatpush1.bf16.msra.mxu0 0
  %1770 = vmatprep.subr.bf16.mxu0 0
  %1771 = vmatpush1.bf16.msra.mxu0 0
  %1772 = vmatprep.subr.bf16.mxu0 0
  %1773 = vmatpush1.bf16.msra.mxu0 0
  %1774 = vmatprep.subr.bf16.mxu0 0
  %1775 = vmatpush1.bf16.msra.mxu0 0
  %1776 = vmatprep.subr.bf16.mxu0 0
  %1777 = vmatpush1.bf16.msra.mxu0 0
  %1778 = vmatprep.subr.bf16.mxu0 0
  %1779 = vmatpush1.bf16.msra.mxu0 0
  %1780 = vmatprep.subr.bf16.mxu0 0
  %1781 = vmatpush1.bf16.msra.mxu0 0
  %1782 = vmatprep.subr.bf16.mxu0 0
  %1783 = vmatpush1.bf16.msra.mxu0 0
  %1784 = vmatprep.mubr.bf16.mxu0 0
  %1785 = vmatmul.mubr.bf16.gmra.mrb[0].mxu0 %v1657
  %v1786 = vpop.f32.mrb[0].mxu0
  %v1787 = vadd.f32 %v1630, %v1786
  %v1788 = vpop.f32.mrb[0].mxu0
  %v1789 = vpop.f32.mrb[0].mxu0
  %v1790 = vadd.f32 %v1630, %v1789
  %v1791 = vpop.f32.mrb[0].mxu0
  %1792 = vmatprep.mubr.bf16.mxu0 0
  %1793 = vmatmul.mubr.bf16.gmra.mrb[0].mxu0 %v1660
  %v1794 = vpop.f32.mrb[0].mxu0
  %v1795 = vadd.f32 %v1630, %v1794
  %v1796 = vpop.f32.mrb[0].mxu0
  %v1797 = vpop.f32.mrb[0].mxu0
  %v1798 = vadd.f32 %v1630, %v1797
  %v1799 = vpop.f32.mrb[0].mxu0
  %1800 = vmatprep.mubr.bf16.mxu0 0
  %1801 = vmatmul.mubr.bf16.gmra.mrb[0].mxu0 %v1663
  %v1802 = vpop.f32.mrb[0].mxu0
  %v1803 = vadd.f32 %v1630, %v1802
  %v1804 = vpop.f32.mrb[0].mxu0
  %v1805 = vpop.f32.mrb[0].mxu0
  %v1806 = vadd.f32 %v1630, %v1805
  %v1807 = vpop.f32.mrb[0].mxu0
  %1808 = vmatprep.mubr.bf16.mxu0 0
  %1809 = vmatmul.mubr.bf16.gmra.mrb[0].mxu0 %v1666
  %v1810 = vpop.f32.mrb[0].mxu0
  %v1811 = vadd.f32 %v1630, %v1810
  %v1812 = vpop.f32.mrb[0].mxu0
  %v1813 = vpop.f32.mrb[0].mxu0
  %v1814 = vadd.f32 %v1630, %v1813
  %v1815 = vpop.f32.mrb[0].mxu0
  %1816 = vmatprep.mubr.bf16.mxu0 0
  %1817 = vmatmul.mubr.bf16.gmra.mrb[0].mxu0 %v1669
  %v1818 = vpop.f32.mrb[0].mxu0
  %v1819 = vadd.f32 %v1630, %v1818
  %v1820 = vpop.f32.mrb[0].mxu0
  %v1821 = vpop.f32.mrb[0].mxu0
  %v1822 = vadd.f32 %v1630, %v1821
  %v1823 = vpop.f32.mrb[0].mxu0
  %1824 = vmatprep.mubr.bf16.mxu0 0
  %1825 = vmatmul.mubr.bf16.gmra.mrb[0].mxu0 %v1672
  %v1826 = vpop.f32.mrb[0].mxu0
  %v1827 = vadd.f32 %v1630, %v1826
  %v1828 = vpop.f32.mrb[0].mxu0
  %v1829 = vpop.f32.mrb[0].mxu0
  %v1830 = vadd.f32 %v1630, %v1829
  %v1831 = vpop.f32.mrb[0].mxu0
  %1832 = vmatprep.mubr.bf16.mxu0 0
  %1833 = vmatmul.mubr.bf16.gmra.mrb[0].mxu0 %v1675
  %v1834 = vpop.f32.mrb[0].mxu0
  %v1835 = vadd.f32 %v1630, %v1834
  %v1836 = vpop.f32.mrb[0].mxu0
  %v1837 = vpop.f32.mrb[0].mxu0
  %v1838 = vadd.f32 %v1630, %v1837
  %v1839 = vpop.f32.mrb[0].mxu0
  %1840 = vmatprep.mubr.bf16.mxu0 0
  %1841 = vmatmul.mubr.bf16.gmra.mrb[0].mxu0 %v1678
  %v1842 = vpop.f32.mrb[0].mxu0
  %v1843 = vadd.f32 %v1630, %v1842
  %v1844 = vpop.f32.mrb[0].mxu0
  %v1845 = vpop.f32.mrb[0].mxu0
  %v1846 = vadd.f32 %v1630, %v1845
  %v1847 = vpop.f32.mrb[0].mxu0
  %1848 = vmatprep.mubr.bf16.mxu0 0
  %1849 = vmatmul.mubr.bf16.gmra.mrb[0].mxu0 %v1681
  %v1850 = vpop.f32.mrb[0].mxu0
  %v1851 = vadd.f32 %v1630, %v1850
  %v1852 = vpop.f32.mrb[0].mxu0
  %v1853 = vpop.f32.mrb[0].mxu0
  %v1854 = vadd.f32 %v1630, %v1853
  %v1855 = vpop.f32.mrb[0].mxu0
  %1856 = vmatprep.mubr.bf16.mxu0 0
  %1857 = vmatmul.mubr.bf16.gmra.mrb[0].mxu0 %v1684
  %v1858 = vpop.f32.mrb[0].mxu0
  %v1859 = vadd.f32 %v1630, %v1858
  %v1860 = vpop.f32.mrb[0].mxu0
  %v1861 = vpop.f32.mrb[0].mxu0
  %v1862 = vadd.f32 %v1630, %v1861
  %v1863 = vpop.f32.mrb[0].mxu0
  %1864 = vmatprep.mubr.bf16.mxu0 0
  %1865 = vmatmul.mubr.bf16.gmra.mrb[0].mxu0 %v1687
  %v1866 = vpop.f32.mrb[0].mxu0
  %v1867 = vadd.f32 %v1630, %v1866
  %v1868 = vpop.f32.mrb[0].mxu0
  %v1869 = vpop.f32.mrb[0].mxu0
  %v1870 = vadd.f32 %v1630, %v1869
  %v1871 = vpop.f32.mrb[0].mxu0
  %1872 = vmatprep.mubr.bf16.mxu0 0
  %1873 = vmatmul.mubr.bf16.gmra.mrb[0].mxu0 %v1690
  %v1874 = vpop.f32.mrb[0].mxu0
  %v1875 = vadd.f32 %v1630, %v1874
  %v1876 = vpop.f32.mrb[0].mxu0
  %v1877 = vpop.f32.mrb[0].mxu0
  %v1878 = vadd.f32 %v1630, %v1877
  %v1879 = vpop.f32.mrb[0].mxu0
  %1880 = vmatprep.mubr.bf16.mxu0 0
  %1881 = vmatmul.mubr.bf16.gmra.mrb[0].mxu0 %v1693
  %v1882 = vpop.f32.mrb[0].mxu0
  %v1883 = vadd.f32 %v1630, %v1882
  %v1884 = vpop.f32.mrb[0].mxu0
  %v1885 = vpop.f32.mrb[0].mxu0
  %v1886 = vadd.f32 %v1630, %v1885
  %v1887 = vpop.f32.mrb[0].mxu0
  %1888 = vmatprep.mubr.bf16.mxu0 0
  %1889 = vmatmul.mubr.bf16.gmra.mrb[0].mxu0 %v1696
  %v1890 = vpop.f32.mrb[0].mxu0
  %v1891 = vadd.f32 %v1630, %v1890
  %v1892 = vpop.f32.mrb[0].mxu0
  %v1893 = vpop.f32.mrb[0].mxu0
  %v1894 = vadd.f32 %v1630, %v1893
  %v1895 = vpop.f32.mrb[0].mxu0
  %1896 = vmatprep.mubr.bf16.mxu0 0
  %1897 = vmatmul.mubr.bf16.gmra.mrb[0].mxu0 %v1699
  %v1898 = vpop.f32.mrb[0].mxu0
  %v1899 = vadd.f32 %v1630, %v1898
  %v1900 = vpop.f32.mrb[0].mxu0
  %v1901 = vpop.f32.mrb[0].mxu0
  %v1902 = vadd.f32 %v1630, %v1901
  %v1903 = vpop.f32.mrb[0].mxu0
  %1904 = vmatprep.mubr.bf16.mxu0 0
  %1905 = vmatmul.mubr.bf16.gmra.mrb[0].mxu0 %v1702
  %v1906 = vpop.f32.mrb[0].mxu0
  %v1907 = vadd.f32 %v1630, %v1906
  %v1908 = vpop.f32.mrb[0].mxu0
  %v1909 = vpop.f32.mrb[0].mxu0
  %v1910 = vadd.f32 %v1630, %v1909
  %v1911 = vpop.f32.mrb[0].mxu0
  %1912 = vmatprep.mubr.bf16.mxu0 0
  %1913 = vmatmul.mubr.bf16.gmra.mrb[0].mxu0 %v1705
  %v1914 = vpop.f32.mrb[0].mxu0
  %v1915 = vadd.f32 %v1630, %v1914
  %v1916 = vpop.f32.mrb[0].mxu0
  %v1917 = vpop.f32.mrb[0].mxu0
  %v1918 = vadd.f32 %v1630, %v1917
  %v1919 = vpop.f32.mrb[0].mxu0
  %1920 = vmatprep.mubr.bf16.mxu0 0
  %1921 = vmatmul.mubr.bf16.gmra.mrb[0].mxu0 %v1708
  %v1922 = vpop.f32.mrb[0].mxu0
  %v1923 = vadd.f32 %v1630, %v1922
  %v1924 = vpop.f32.mrb[0].mxu0
  %v1925 = vpop.f32.mrb[0].mxu0
  %v1926 = vadd.f32 %v1630, %v1925
  %v1927 = vpop.f32.mrb[0].mxu0
  %1928 = vmatprep.mubr.bf16.mxu0 0
  %1929 = vmatmul.mubr.bf16.gmra.mrb[0].mxu0 %v1711
  %v1930 = vpop.f32.mrb[0].mxu0
  %v1931 = vadd.f32 %v1630, %v1930
  %v1932 = vpop.f32.mrb[0].mxu0
  %v1933 = vpop.f32.mrb[0].mxu0
  %v1934 = vadd.f32 %v1630, %v1933
  %v1935 = vpop.f32.mrb[0].mxu0
  %1936 = vmatprep.mubr.bf16.mxu0 0
  %1937 = vmatmul.mubr.bf16.gmra.mrb[0].mxu0 %v1714
  %v1938 = vpop.f32.mrb[0].mxu0
  %v1939 = vadd.f32 %v1630, %v1938
  %v1940 = vpop.f32.mrb[0].mxu0
  %v1941 = vpop.f32.mrb[0].mxu0
  %v1942 = vadd.f32 %v1630, %v1941
  %v1943 = vpop.f32.mrb[0].mxu0
  %1944 = vmatprep.mubr.bf16.mxu0 0
  %1945 = vmatmul.mubr.bf16.gmra.mrb[0].mxu0 %v1717
  %v1946 = vpop.f32.mrb[0].mxu0
  %v1947 = vadd.f32 %v1630, %v1946
  %v1948 = vpop.f32.mrb[0].mxu0
  %v1949 = vpop.f32.mrb[0].mxu0
  %v1950 = vadd.f32 %v1630, %v1949
  %v1951 = vpop.f32.mrb[0].mxu0
  %1952 = vmatprep.mubr.bf16.mxu0 0
  %1953 = vmatmul.mubr.bf16.gmra.mrb[0].mxu0 %v1720
  %v1954 = vpop.f32.mrb[0].mxu0
  %v1955 = vadd.f32 %v1630, %v1954
  %v1956 = vpop.f32.mrb[0].mxu0
  %v1957 = vpop.f32.mrb[0].mxu0
  %v1958 = vadd.f32 %v1630, %v1957
  %v1959 = vpop.f32.mrb[0].mxu0
  %1960 = vmatprep.mubr.bf16.mxu0 0
  %1961 = vmatmul.mubr.bf16.gmra.mrb[0].mxu0 %v1723
  %v1962 = vpop.f32.mrb[0].mxu0
  %v1963 = vadd.f32 %v1630, %v1962
  %v1964 = vpop.f32.mrb[0].mxu0
  %v1965 = vpop.f32.mrb[0].mxu0
  %v1966 = vadd.f32 %v1630, %v1965
  %v1967 = vpop.f32.mrb[0].mxu0
  %1968 = vmatprep.mubr.bf16.mxu0 0
  %1969 = vmatmul.mubr.bf16.gmra.mrb[0].mxu0 %v1726
  %v1970 = vpop.f32.mrb[0].mxu0
  %v1971 = vadd.f32 %v1630, %v1970
  %v1972 = vpop.f32.mrb[0].mxu0
  %v1973 = vpop.f32.mrb[0].mxu0
  %v1974 = vadd.f32 %v1630, %v1973
  %v1975 = vpop.f32.mrb[0].mxu0
  %1976 = vmatprep.mubr.bf16.mxu0 0
  %1977 = vmatmul.mubr.bf16.gmra.mrb[0].mxu0 %v1729
  %v1978 = vpop.f32.mrb[0].mxu0
  %v1979 = vadd.f32 %v1630, %v1978
  %v1980 = vpop.f32.mrb[0].mxu0
  %v1981 = vpop.f32.mrb[0].mxu0
  %v1982 = vadd.f32 %v1630, %v1981
  %v1983 = vpop.f32.mrb[0].mxu0
  %1984 = vmatprep.mubr.bf16.mxu0 0
  %1985 = vmatmul.mubr.bf16.gmra.mrb[0].mxu0 %v1732
  %v1986 = vpop.f32.mrb[0].mxu0
  %v1987 = vadd.f32 %v1630, %v1986
  %v1988 = vpop.f32.mrb[0].mxu0
  %v1989 = vpop.f32.mrb[0].mxu0
  %v1990 = vadd.f32 %v1630, %v1989
  %v1991 = vpop.f32.mrb[0].mxu0
  %1992 = vmatprep.mubr.bf16.mxu0 0
  %1993 = vmatmul.mubr.bf16.gmra.mrb[0].mxu0 %v1735
  %v1994 = vpop.f32.mrb[0].mxu0
  %v1995 = vadd.f32 %v1630, %v1994
  %v1996 = vpop.f32.mrb[0].mxu0
  %v1997 = vpop.f32.mrb[0].mxu0
  %v1998 = vadd.f32 %v1630, %v1997
  %v1999 = vpop.f32.mrb[0].mxu0
  %2000 = vmatprep.mubr.bf16.mxu0 0
  %2001 = vmatmul.mubr.bf16.gmra.mrb[0].mxu0 %v1738
  %v2002 = vpop.f32.mrb[0].mxu0
  %v2003 = vadd.f32 %v1630, %v2002
  %v2004 = vpop.f32.mrb[0].mxu0
  %v2005 = vpop.f32.mrb[0].mxu0
  %v2006 = vadd.f32 %v1630, %v2005
  %v2007 = vpop.f32.mrb[0].mxu0
  %2008 = vmatprep.mubr.bf16.mxu0 0
  %2009 = vmatmul.mubr.bf16.gmra.mrb[0].mxu0 %v1741
  %v2010 = vpop.f32.mrb[0].mxu0
  %v2011 = vadd.f32 %v1630, %v2010
  %v2012 = vpop.f32.mrb[0].mxu0
  %v2013 = vpop.f32.mrb[0].mxu0
  %v2014 = vadd.f32 %v1630, %v2013
  %v2015 = vpop.f32.mrb[0].mxu0
  %2016 = vmatprep.mubr.bf16.mxu0 0
  %2017 = vmatmul.mubr.bf16.gmra.mrb[0].mxu0 %v1744
  %v2018 = vpop.f32.mrb[0].mxu0
  %v2019 = vadd.f32 %v1630, %v2018
  %v2020 = vpop.f32.mrb[0].mxu0
  %v2021 = vpop.f32.mrb[0].mxu0
  %v2022 = vadd.f32 %v1630, %v2021
  %v2023 = vpop.f32.mrb[0].mxu0
  %2024 = vmatprep.mubr.bf16.mxu0 0
  %2025 = vmatmul.mubr.bf16.gmra.mrb[0].mxu0 %v1747
  %v2026 = vpop.f32.mrb[0].mxu0
  %v2027 = vadd.f32 %v1630, %v2026
  %v2028 = vpop.f32.mrb[0].mxu0
  %v2029 = vpop.f32.mrb[0].mxu0
  %v2030 = vadd.f32 %v1630, %v2029
  %v2031 = vpop.f32.mrb[0].mxu0
  %2032 = vmatprep.mubr.bf16.mxu0 0
  %2033 = vmatmul.mubr.bf16.gmra.mrb[0].mxu0 %v1750
  %v2034 = vpop.f32.mrb[0].mxu0
  %v2035 = vadd.f32 %v1630, %v2034
  %v2036 = vpop.f32.mrb[0].mxu0
  %v2037 = vpop.f32.mrb[0].mxu0
  %v2038 = vadd.f32 %v1630, %v2037
  %v2039 = vpop.f32.mrb[0].mxu0
  %2040 = vdwg.mxu0
  %v2041 = vmax.f32 %v1787, 0.0
  %v2042 = vmax.f32 %v1790, 0.0
  %v2043 = vmax.f32 %v1795, 0.0
  %v2044 = vmax.f32 %v1798, 0.0
  %v2045 = vmax.f32 %v1803, 0.0
  %v2046 = vmax.f32 %v1806, 0.0
  %v2047 = vmax.f32 %v1811, 0.0
  %v2048 = vmax.f32 %v1814, 0.0
  %v2049 = vmax.f32 %v1819, 0.0
  %v2050 = vmax.f32 %v1822, 0.0
  %v2051 = vmax.f32 %v1827, 0.0
  %v2052 = vmax.f32 %v1830, 0.0
  %v2053 = vmax.f32 %v1835, 0.0
  %v2054 = vmax.f32 %v1838, 0.0
  %v2055 = vmax.f32 %v1843, 0.0
  %v2056 = vmax.f32 %v1846, 0.0
  %v2057 = vmax.f32 %v1851, 0.0
  %v2058 = vmax.f32 %v1854, 0.0
  %v2059 = vmax.f32 %v1859, 0.0
  %v2060 = vmax.f32 %v1862, 0.0
  %v2061 = vmax.f32 %v1867, 0.0
  %v2062 = vmax.f32 %v1870, 0.0
  %v2063 = vmax.f32 %v1875, 0.0
  %v2064 = vmax.f32 %v1878, 0.0
  %v2065 = vmax.f32 %v1883, 0.0
  %v2066 = vmax.f32 %v1886, 0.0
  %v2067 = vmax.f32 %v1891, 0.0
  %v2068 = vmax.f32 %v1894, 0.0
  %v2069 = vmax.f32 %v1899, 0.0
  %v2070 = vmax.f32 %v1902, 0.0
  %v2071 = vmax.f32 %v1907, 0.0
  %v2072 = vmax.f32 %v1910, 0.0
  %v2073 = vmax.f32 %v1915, 0.0
  %v2074 = vmax.f32 %v1918, 0.0
  %v2075 = vmax.f32 %v1923, 0.0
  %v2076 = vmax.f32 %v1926, 0.0
  %v2077 = vmax.f32 %v1931, 0.0
  %v2078 = vmax.f32 %v1934, 0.0
  %v2079 = vmax.f32 %v1939, 0.0
  %v2080 = vmax.f32 %v1942, 0.0
  %v2081 = vmax.f32 %v1947, 0.0
  %v2082 = vmax.f32 %v1950, 0.0
  %v2083 = vmax.f32 %v1955, 0.0
  %v2084 = vmax.f32 %v1958, 0.0
  %v2085 = vmax.f32 %v1963, 0.0
  %v2086 = vmax.f32 %v1966, 0.0
  %v2087 = vmax.f32 %v1971, 0.0
  %v2088 = vmax.f32 %v1974, 0.0
  %v2089 = vmax.f32 %v1979, 0.0
  %v2090 = vmax.f32 %v1982, 0.0
  %v2091 = vmax.f32 %v1987, 0.0
  %v2092 = vmax.f32 %v1990, 0.0
  %v2093 = vmax.f32 %v1995, 0.0
  %v2094 = vmax.f32 %v1998, 0.0
  %v2095 = vmax.f32 %v2003, 0.0
  %v2096 = vmax.f32 %v2006, 0.0
  %v2097 = vmax.f32 %v2011, 0.0
  %v2098 = vmax.f32 %v2014, 0.0
  %v2099 = vmax.f32 %v2019, 0.0
  %v2100 = vmax.f32 %v2022, 0.0
  %v2101 = vmax.f32 %v2027, 0.0
  %v2102 = vmax.f32 %v2030, 0.0
  %v2103 = vmax.f32 %v2035, 0.0
  %v2104 = vmax.f32 %v2038, 0.0
  %v2105 = vpack.c.bf16 %v2042, %v2041
  %v2106 = vpack.c.bf16 %v2044, %v2043
  %v2107 = vpack.c.bf16 %v2046, %v2045
  %v2108 = vpack.c.bf16 %v2048, %v2047
  %v2109 = vpack.c.bf16 %v2050, %v2049
  %v2110 = vpack.c.bf16 %v2052, %v2051
  %v2111 = vpack.c.bf16 %v2054, %v2053
  %v2112 = vpack.c.bf16 %v2056, %v2055
  %v2113 = vpack.c.bf16 %v2058, %v2057
  %v2114 = vpack.c.bf16 %v2060, %v2059
  %v2115 = vpack.c.bf16 %v2062, %v2061
  %v2116 = vpack.c.bf16 %v2064, %v2063
  %v2117 = vpack.c.bf16 %v2066, %v2065
  %v2118 = vpack.c.bf16 %v2068, %v2067
  %v2119 = vpack.c.bf16 %v2070, %v2069
  %v2120 = vpack.c.bf16 %v2072, %v2071
  %v2121 = vpack.c.bf16 %v2074, %v2073
  %v2122 = vpack.c.bf16 %v2076, %v2075
  %v2123 = vpack.c.bf16 %v2078, %v2077
  %v2124 = vpack.c.bf16 %v2080, %v2079
  %v2125 = vpack.c.bf16 %v2082, %v2081
  %v2126 = vpack.c.bf16 %v2084, %v2083
  %v2127 = vpack.c.bf16 %v2086, %v2085
  %v2128 = vpack.c.bf16 %v2088, %v2087
  %v2129 = vpack.c.bf16 %v2090, %v2089
  %v2130 = vpack.c.bf16 %v2092, %v2091
  %v2131 = vpack.c.bf16 %v2094, %v2093
  %v2132 = vpack.c.bf16 %v2096, %v2095
  %v2133 = vpack.c.bf16 %v2098, %v2097
  %v2134 = vpack.c.bf16 %v2100, %v2099
  %v2135 = vpack.c.bf16 %v2102, %v2101
  %v2136 = vpack.c.bf16 %v2104, %v2103
  %v2137 = vld [vmem:[%s5] sm:$0xf]
  %v2138 = vld [vmem:[%s5 + $0x4] sm:$0xf]
  %v2139 = vld [vmem:[%s5 + $0x8] sm:$0xf]
  %v2140 = vld [vmem:[%s5 + $0xc] sm:$0xf]
  %v2141 = vld [vmem:[%s5 + $0x10] sm:$0xf]
  %v2142 = vld [vmem:[%s5 + $0x14] sm:$0xf]
  %v2143 = vld [vmem:[%s5 + $0x18] sm:$0xf]
  %v2144 = vld [vmem:[%s5 + $0x1c] sm:$0xf]
  %v2145 = vld [vmem:[%s5 + $0x20] sm:$0xf]
  %v2146 = vld [vmem:[%s5 + $0x24] sm:$0xf]
  %v2147 = vld [vmem:[%s5 + $0x28] sm:$0xf]
  %v2148 = vld [vmem:[%s5 + $0x2c] sm:$0xf]
  %v2149 = vld [vmem:[%s5 + $0x30] sm:$0xf]
  %v2150 = vld [vmem:[%s5 + $0x34] sm:$0xf]
  %v2151 = vld [vmem:[%s5 + $0x38] sm:$0xf]
  %v2152 = vld [vmem:[%s5 + $0x3c] sm:$0xf]
  %v2153 = vld [vmem:[%s10] sm:$0x1]
  %v2155 = vlaneseq
  %v2156 = vshrl.u32 %v2155, 7
  %v2157 = vsub.s32 0, %v2156
  %v2158 = vrot.slane %v2153, %v2157
  %v2176 = vunpack.c.l.b16 %v2137
  %v2177 = vunpack.c.l.b16 %v2138
  %v2178 = vunpack.c.l.b16 %v2139
  %v2179 = vunpack.c.l.b16 %v2140
  %v2180 = vunpack.c.l.b16 %v2141
  %v2181 = vunpack.c.l.b16 %v2142
  %v2182 = vunpack.c.l.b16 %v2143
  %v2183 = vunpack.c.l.b16 %v2144
  %v2184 = vunpack.c.l.b16 %v2145
  %v2185 = vunpack.c.l.b16 %v2146
  %v2186 = vunpack.c.l.b16 %v2147
  %v2187 = vunpack.c.l.b16 %v2148
  %v2188 = vunpack.c.l.b16 %v2149
  %v2189 = vunpack.c.l.b16 %v2150
  %v2190 = vunpack.c.l.b16 %v2151
  %v2191 = vunpack.c.l.b16 %v2152
  %v2192 = vpack.c.b16 %v2177, %v2176
  %v2193 = vpack.c.b16 %v2179, %v2178
  %v2194 = vpack.c.b16 %v2181, %v2180
  %v2195 = vpack.c.b16 %v2183, %v2182
  %v2196 = vpack.c.b16 %v2185, %v2184
  %v2197 = vpack.c.b16 %v2187, %v2186
  %v2198 = vpack.c.b16 %v2189, %v2188
  %v2199 = vpack.c.b16 %v2191, %v2190
  %2208 = vmatprep.subr.bf16.mxu0 0
  %2209 = vmatpush1.bf16.msra.mxu0 %v2192
  %2210 = vmatprep.subr.bf16.mxu0 0
  %2211 = vmatpush1.bf16.msra.mxu0 %v2193
  %2212 = vmatprep.subr.bf16.mxu0 0
  %2213 = vmatpush1.bf16.msra.mxu0 %v2194
  %2214 = vmatprep.subr.bf16.mxu0 0
  %2215 = vmatpush1.bf16.msra.mxu0 %v2195
  %2216 = vmatprep.subr.bf16.mxu0 0
  %2217 = vmatpush1.bf16.msra.mxu0 %v2196
  %2218 = vmatprep.subr.bf16.mxu0 0
  %2219 = vmatpush1.bf16.msra.mxu0 %v2197
  %2220 = vmatprep.subr.bf16.mxu0 0
  %2221 = vmatpush1.bf16.msra.mxu0 %v2198
  %2222 = vmatprep.subr.bf16.mxu0 0
  %2223 = vmatpush1.bf16.msra.mxu0 %v2199
  %2224 = vmatprep.subr.bf16.mxu0 0
  %2225 = vmatpush1.bf16.msra.mxu0 0
  %2226 = vmatprep.subr.bf16.mxu0 0
  %2227 = vmatpush1.bf16.msra.mxu0 0
  %2228 = vmatprep.subr.bf16.mxu0 0
  %2229 = vmatpush1.bf16.msra.mxu0 0
  %2230 = vmatprep.subr.bf16.mxu0 0
  %2231 = vmatpush1.bf16.msra.mxu0 0
  %2232 = vmatprep.subr.bf16.mxu0 0
  %2233 = vmatpush1.bf16.msra.mxu0 0
  %2234 = vmatprep.subr.bf16.mxu0 0
  %2235 = vmatpush1.bf16.msra.mxu0 0
  %2236 = vmatprep.subr.bf16.mxu0 0
  %2237 = vmatpush1.bf16.msra.mxu0 0
  %2238 = vmatprep.subr.bf16.mxu0 0
  %2239 = vmatpush1.bf16.msra.mxu0 0
  %2240 = vmatprep.mubr.bf16.mxu0 0
  %2241 = vmatmul.mubr.bf16.gmra.mrb[0].mxu0 %v2105
  %v2242 = vpop.f32.mrb[0].mxu0
  %v2243 = vadd.f32 %v2158, %v2242
  %v2244 = vpop.f32.mrb[0].mxu0
  %v2245 = vpop.f32.mrb[0].mxu0
  %v2246 = vadd.f32 %v2158, %v2245
  %v2247 = vpop.f32.mrb[0].mxu0
  %2248 = vmatprep.mubr.bf16.mxu0 0
  %2249 = vmatmul.mubr.bf16.gmra.mrb[0].mxu0 %v2106
  %v2250 = vpop.f32.mrb[0].mxu0
  %v2251 = vadd.f32 %v2158, %v2250
  %v2252 = vpop.f32.mrb[0].mxu0
  %v2253 = vpop.f32.mrb[0].mxu0
  %v2254 = vadd.f32 %v2158, %v2253
  %v2255 = vpop.f32.mrb[0].mxu0
  %2256 = vmatprep.mubr.bf16.mxu0 0
  %2257 = vmatmul.mubr.bf16.gmra.mrb[0].mxu0 %v2107
  %v2258 = vpop.f32.mrb[0].mxu0
  %v2259 = vadd.f32 %v2158, %v2258
  %v2260 = vpop.f32.mrb[0].mxu0
  %v2261 = vpop.f32.mrb[0].mxu0
  %v2262 = vadd.f32 %v2158, %v2261
  %v2263 = vpop.f32.mrb[0].mxu0
  %2264 = vmatprep.mubr.bf16.mxu0 0
  %2265 = vmatmul.mubr.bf16.gmra.mrb[0].mxu0 %v2108
  %v2266 = vpop.f32.mrb[0].mxu0
  %v2267 = vadd.f32 %v2158, %v2266
  %v2268 = vpop.f32.mrb[0].mxu0
  %v2269 = vpop.f32.mrb[0].mxu0
  %v2270 = vadd.f32 %v2158, %v2269
  %v2271 = vpop.f32.mrb[0].mxu0
  %2272 = vmatprep.mubr.bf16.mxu0 0
  %2273 = vmatmul.mubr.bf16.gmra.mrb[0].mxu0 %v2109
  %v2274 = vpop.f32.mrb[0].mxu0
  %v2275 = vadd.f32 %v2158, %v2274
  %v2276 = vpop.f32.mrb[0].mxu0
  %v2277 = vpop.f32.mrb[0].mxu0
  %v2278 = vadd.f32 %v2158, %v2277
  %v2279 = vpop.f32.mrb[0].mxu0
  %2280 = vmatprep.mubr.bf16.mxu0 0
  %2281 = vmatmul.mubr.bf16.gmra.mrb[0].mxu0 %v2110
  %v2282 = vpop.f32.mrb[0].mxu0
  %v2283 = vadd.f32 %v2158, %v2282
  %v2284 = vpop.f32.mrb[0].mxu0
  %v2285 = vpop.f32.mrb[0].mxu0
  %v2286 = vadd.f32 %v2158, %v2285
  %v2287 = vpop.f32.mrb[0].mxu0
  %2288 = vmatprep.mubr.bf16.mxu0 0
  %2289 = vmatmul.mubr.bf16.gmra.mrb[0].mxu0 %v2111
  %v2290 = vpop.f32.mrb[0].mxu0
  %v2291 = vadd.f32 %v2158, %v2290
  %v2292 = vpop.f32.mrb[0].mxu0
  %v2293 = vpop.f32.mrb[0].mxu0
  %v2294 = vadd.f32 %v2158, %v2293
  %v2295 = vpop.f32.mrb[0].mxu0
  %2296 = vmatprep.mubr.bf16.mxu0 0
  %2297 = vmatmul.mubr.bf16.gmra.mrb[0].mxu0 %v2112
  %v2298 = vpop.f32.mrb[0].mxu0
  %v2299 = vadd.f32 %v2158, %v2298
  %v2300 = vpop.f32.mrb[0].mxu0
  %v2301 = vpop.f32.mrb[0].mxu0
  %v2302 = vadd.f32 %v2158, %v2301
  %v2303 = vpop.f32.mrb[0].mxu0
  %2304 = vmatprep.mubr.bf16.mxu0 0
  %2305 = vmatmul.mubr.bf16.gmra.mrb[0].mxu0 %v2113
  %v2306 = vpop.f32.mrb[0].mxu0
  %v2307 = vadd.f32 %v2158, %v2306
  %v2308 = vpop.f32.mrb[0].mxu0
  %v2309 = vpop.f32.mrb[0].mxu0
  %v2310 = vadd.f32 %v2158, %v2309
  %v2311 = vpop.f32.mrb[0].mxu0
  %2312 = vmatprep.mubr.bf16.mxu0 0
  %2313 = vmatmul.mubr.bf16.gmra.mrb[0].mxu0 %v2114
  %v2314 = vpop.f32.mrb[0].mxu0
  %v2315 = vadd.f32 %v2158, %v2314
  %v2316 = vpop.f32.mrb[0].mxu0
  %v2317 = vpop.f32.mrb[0].mxu0
  %v2318 = vadd.f32 %v2158, %v2317
  %v2319 = vpop.f32.mrb[0].mxu0
  %2320 = vmatprep.mubr.bf16.mxu0 0
  %2321 = vmatmul.mubr.bf16.gmra.mrb[0].mxu0 %v2115
  %v2322 = vpop.f32.mrb[0].mxu0
  %v2323 = vadd.f32 %v2158, %v2322
  %v2324 = vpop.f32.mrb[0].mxu0
  %v2325 = vpop.f32.mrb[0].mxu0
  %v2326 = vadd.f32 %v2158, %v2325
  %v2327 = vpop.f32.mrb[0].mxu0
  %2328 = vmatprep.mubr.bf16.mxu0 0
  %2329 = vmatmul.mubr.bf16.gmra.mrb[0].mxu0 %v2116
  %v2330 = vpop.f32.mrb[0].mxu0
  %v2331 = vadd.f32 %v2158, %v2330
  %v2332 = vpop.f32.mrb[0].mxu0
  %v2333 = vpop.f32.mrb[0].mxu0
  %v2334 = vadd.f32 %v2158, %v2333
  %v2335 = vpop.f32.mrb[0].mxu0
  %2336 = vmatprep.mubr.bf16.mxu0 0
  %2337 = vmatmul.mubr.bf16.gmra.mrb[0].mxu0 %v2117
  %v2338 = vpop.f32.mrb[0].mxu0
  %v2339 = vadd.f32 %v2158, %v2338
  %v2340 = vpop.f32.mrb[0].mxu0
  %v2341 = vpop.f32.mrb[0].mxu0
  %v2342 = vadd.f32 %v2158, %v2341
  %v2343 = vpop.f32.mrb[0].mxu0
  %2344 = vmatprep.mubr.bf16.mxu0 0
  %2345 = vmatmul.mubr.bf16.gmra.mrb[0].mxu0 %v2118
  %v2346 = vpop.f32.mrb[0].mxu0
  %v2347 = vadd.f32 %v2158, %v2346
  %v2348 = vpop.f32.mrb[0].mxu0
  %v2349 = vpop.f32.mrb[0].mxu0
  %v2350 = vadd.f32 %v2158, %v2349
  %v2351 = vpop.f32.mrb[0].mxu0
  %2352 = vmatprep.mubr.bf16.mxu0 0
  %2353 = vmatmul.mubr.bf16.gmra.mrb[0].mxu0 %v2119
  %v2354 = vpop.f32.mrb[0].mxu0
  %v2355 = vadd.f32 %v2158, %v2354
  %v2356 = vpop.f32.mrb[0].mxu0
  %v2357 = vpop.f32.mrb[0].mxu0
  %v2358 = vadd.f32 %v2158, %v2357
  %v2359 = vpop.f32.mrb[0].mxu0
  %2360 = vmatprep.mubr.bf16.mxu0 0
  %2361 = vmatmul.mubr.bf16.gmra.mrb[0].mxu0 %v2120
  %v2362 = vpop.f32.mrb[0].mxu0
  %v2363 = vadd.f32 %v2158, %v2362
  %v2364 = vpop.f32.mrb[0].mxu0
  %v2365 = vpop.f32.mrb[0].mxu0
  %v2366 = vadd.f32 %v2158, %v2365
  %v2367 = vpop.f32.mrb[0].mxu0
  %2368 = vmatprep.mubr.bf16.mxu0 0
  %2369 = vmatmul.mubr.bf16.gmra.mrb[0].mxu0 %v2121
  %v2370 = vpop.f32.mrb[0].mxu0
  %v2371 = vadd.f32 %v2158, %v2370
  %v2372 = vpop.f32.mrb[0].mxu0
  %v2373 = vpop.f32.mrb[0].mxu0
  %v2374 = vadd.f32 %v2158, %v2373
  %v2375 = vpop.f32.mrb[0].mxu0
  %2376 = vmatprep.mubr.bf16.mxu0 0
  %2377 = vmatmul.mubr.bf16.gmra.mrb[0].mxu0 %v2122
  %v2378 = vpop.f32.mrb[0].mxu0
  %v2379 = vadd.f32 %v2158, %v2378
  %v2380 = vpop.f32.mrb[0].mxu0
  %v2381 = vpop.f32.mrb[0].mxu0
  %v2382 = vadd.f32 %v2158, %v2381
  %v2383 = vpop.f32.mrb[0].mxu0
  %2384 = vmatprep.mubr.bf16.mxu0 0
  %2385 = vmatmul.mubr.bf16.gmra.mrb[0].mxu0 %v2123
  %v2386 = vpop.f32.mrb[0].mxu0
  %v2387 = vadd.f32 %v2158, %v2386
  %v2388 = vpop.f32.mrb[0].mxu0
  %v2389 = vpop.f32.mrb[0].mxu0
  %v2390 = vadd.f32 %v2158, %v2389
  %v2391 = vpop.f32.mrb[0].mxu0
  %2392 = vmatprep.mubr.bf16.mxu0 0
  %2393 = vmatmul.mubr.bf16.gmra.mrb[0].mxu0 %v2124
  %v2394 = vpop.f32.mrb[0].mxu0
  %v2395 = vadd.f32 %v2158, %v2394
  %v2396 = vpop.f32.mrb[0].mxu0
  %v2397 = vpop.f32.mrb[0].mxu0
  %v2398 = vadd.f32 %v2158, %v2397
  %v2399 = vpop.f32.mrb[0].mxu0
  %2400 = vmatprep.mubr.bf16.mxu0 0
  %2401 = vmatmul.mubr.bf16.gmra.mrb[0].mxu0 %v2125
  %v2402 = vpop.f32.mrb[0].mxu0
  %v2403 = vadd.f32 %v2158, %v2402
  %v2404 = vpop.f32.mrb[0].mxu0
  %v2405 = vpop.f32.mrb[0].mxu0
  %v2406 = vadd.f32 %v2158, %v2405
  %v2407 = vpop.f32.mrb[0].mxu0
  %2408 = vmatprep.mubr.bf16.mxu0 0
  %2409 = vmatmul.mubr.bf16.gmra.mrb[0].mxu0 %v2126
  %v2410 = vpop.f32.mrb[0].mxu0
  %v2411 = vadd.f32 %v2158, %v2410
  %v2412 = vpop.f32.mrb[0].mxu0
  %v2413 = vpop.f32.mrb[0].mxu0
  %v2414 = vadd.f32 %v2158, %v2413
  %v2415 = vpop.f32.mrb[0].mxu0
  %2416 = vmatprep.mubr.bf16.mxu0 0
  %2417 = vmatmul.mubr.bf16.gmra.mrb[0].mxu0 %v2127
  %v2418 = vpop.f32.mrb[0].mxu0
  %v2419 = vadd.f32 %v2158, %v2418
  %v2420 = vpop.f32.mrb[0].mxu0
  %v2421 = vpop.f32.mrb[0].mxu0
  %v2422 = vadd.f32 %v2158, %v2421
  %v2423 = vpop.f32.mrb[0].mxu0
  %2424 = vmatprep.mubr.bf16.mxu0 0
  %2425 = vmatmul.mubr.bf16.gmra.mrb[0].mxu0 %v2128
  %v2426 = vpop.f32.mrb[0].mxu0
  %v2427 = vadd.f32 %v2158, %v2426
  %v2428 = vpop.f32.mrb[0].mxu0
  %v2429 = vpop.f32.mrb[0].mxu0
  %v2430 = vadd.f32 %v2158, %v2429
  %v2431 = vpop.f32.mrb[0].mxu0
  %2432 = vmatprep.mubr.bf16.mxu0 0
  %2433 = vmatmul.mubr.bf16.gmra.mrb[0].mxu0 %v2129
  %v2434 = vpop.f32.mrb[0].mxu0
  %v2435 = vadd.f32 %v2158, %v2434
  %v2436 = vpop.f32.mrb[0].mxu0
  %v2437 = vpop.f32.mrb[0].mxu0
  %v2438 = vadd.f32 %v2158, %v2437
  %v2439 = vpop.f32.mrb[0].mxu0
  %2440 = vmatprep.mubr.bf16.mxu0 0
  %2441 = vmatmul.mubr.bf16.gmra.mrb[0].mxu0 %v2130
  %v2442 = vpop.f32.mrb[0].mxu0
  %v2443 = vadd.f32 %v2158, %v2442
  %v2444 = vpop.f32.mrb[0].mxu0
  %v2445 = vpop.f32.mrb[0].mxu0
  %v2446 = vadd.f32 %v2158, %v2445
  %v2447 = vpop.f32.mrb[0].mxu0
  %2448 = vmatprep.mubr.bf16.mxu0 0
  %2449 = vmatmul.mubr.bf16.gmra.mrb[0].mxu0 %v2131
  %v2450 = vpop.f32.mrb[0].mxu0
  %v2451 = vadd.f32 %v2158, %v2450
  %v2452 = vpop.f32.mrb[0].mxu0
  %v2453 = vpop.f32.mrb[0].mxu0
  %v2454 = vadd.f32 %v2158, %v2453
  %v2455 = vpop.f32.mrb[0].mxu0
  %2456 = vmatprep.mubr.bf16.mxu0 0
  %2457 = vmatmul.mubr.bf16.gmra.mrb[0].mxu0 %v2132
  %v2458 = vpop.f32.mrb[0].mxu0
  %v2459 = vadd.f32 %v2158, %v2458
  %v2460 = vpop.f32.mrb[0].mxu0
  %v2461 = vpop.f32.mrb[0].mxu0
  %v2462 = vadd.f32 %v2158, %v2461
  %v2463 = vpop.f32.mrb[0].mxu0
  %2464 = vmatprep.mubr.bf16.mxu0 0
  %2465 = vmatmul.mubr.bf16.gmra.mrb[0].mxu0 %v2133
  %v2466 = vpop.f32.mrb[0].mxu0
  %v2467 = vadd.f32 %v2158, %v2466
  %v2468 = vpop.f32.mrb[0].mxu0
  %v2469 = vpop.f32.mrb[0].mxu0
  %v2470 = vadd.f32 %v2158, %v2469
  %v2471 = vpop.f32.mrb[0].mxu0
  %2472 = vmatprep.mubr.bf16.mxu0 0
  %2473 = vmatmul.mubr.bf16.gmra.mrb[0].mxu0 %v2134
  %v2474 = vpop.f32.mrb[0].mxu0
  %v2475 = vadd.f32 %v2158, %v2474
  %v2476 = vpop.f32.mrb[0].mxu0
  %v2477 = vpop.f32.mrb[0].mxu0
  %v2478 = vadd.f32 %v2158, %v2477
  %v2479 = vpop.f32.mrb[0].mxu0
  %2480 = vmatprep.mubr.bf16.mxu0 0
  %2481 = vmatmul.mubr.bf16.gmra.mrb[0].mxu0 %v2135
  %v2482 = vpop.f32.mrb[0].mxu0
  %v2483 = vadd.f32 %v2158, %v2482
  %v2484 = vpop.f32.mrb[0].mxu0
  %v2485 = vpop.f32.mrb[0].mxu0
  %v2486 = vadd.f32 %v2158, %v2485
  %v2487 = vpop.f32.mrb[0].mxu0
  %2488 = vmatprep.mubr.bf16.mxu0 0
  %2489 = vmatmul.mubr.bf16.gmra.mrb[0].mxu0 %v2136
  %v2490 = vpop.f32.mrb[0].mxu0
  %v2491 = vadd.f32 %v2158, %v2490
  %v2492 = vpop.f32.mrb[0].mxu0
  %v2493 = vpop.f32.mrb[0].mxu0
  %v2494 = vadd.f32 %v2158, %v2493
  %v2495 = vpop.f32.mrb[0].mxu0
  %2496 = vdwg.mxu0
  %2497 = vst.msk [vmem:[%s11] sm:$0xff] %vm158, %v2243
  %2498 = vst.msk [vmem:[%s11 + $0x8] sm:$0xff] %vm158, %v2246
  %2499 = vst.msk [vmem:[%s11 + $0x10] sm:$0xff] %vm158, %v2251
  %2500 = vst.msk [vmem:[%s11 + $0x18] sm:$0xff] %vm158, %v2254
  %2501 = vst.msk [vmem:[%s11 + $0x20] sm:$0xff] %vm158, %v2259
  %2502 = vst.msk [vmem:[%s11 + $0x28] sm:$0xff] %vm158, %v2262
  %2503 = vst.msk [vmem:[%s11 + $0x30] sm:$0xff] %vm158, %v2267
  %2504 = vst.msk [vmem:[%s11 + $0x38] sm:$0xff] %vm158, %v2270
  %2505 = vst.msk [vmem:[%s11 + $0x40] sm:$0xff] %vm158, %v2275
  %2506 = vst.msk [vmem:[%s11 + $0x48] sm:$0xff] %vm158, %v2278
  %2507 = vst.msk [vmem:[%s11 + $0x50] sm:$0xff] %vm158, %v2283
  %2508 = vst.msk [vmem:[%s11 + $0x58] sm:$0xff] %vm158, %v2286
  %2509 = vst.msk [vmem:[%s11 + $0x60] sm:$0xff] %vm158, %v2291
  %2510 = vst.msk [vmem:[%s11 + $0x68] sm:$0xff] %vm158, %v2294
  %2511 = vst.msk [vmem:[%s11 + $0x70] sm:$0xff] %vm158, %v2299
  %2512 = vst.msk [vmem:[%s11 + $0x78] sm:$0xff] %vm158, %v2302
  %2513 = vst.msk [vmem:[%s11 + $0x80] sm:$0xff] %vm158, %v2307
  %2514 = vst.msk [vmem:[%s11 + $0x88] sm:$0xff] %vm158, %v2310
  %2515 = vst.msk [vmem:[%s11 + $0x90] sm:$0xff] %vm158, %v2315
  %2516 = vst.msk [vmem:[%s11 + $0x98] sm:$0xff] %vm158, %v2318
  %2517 = vst.msk [vmem:[%s11 + $0xa0] sm:$0xff] %vm158, %v2323
  %2518 = vst.msk [vmem:[%s11 + $0xa8] sm:$0xff] %vm158, %v2326
  %2519 = vst.msk [vmem:[%s11 + $0xb0] sm:$0xff] %vm158, %v2331
  %2520 = vst.msk [vmem:[%s11 + $0xb8] sm:$0xff] %vm158, %v2334
  %2521 = vst.msk [vmem:[%s11 + $0xc0] sm:$0xff] %vm158, %v2339
  %2522 = vst.msk [vmem:[%s11 + $0xc8] sm:$0xff] %vm158, %v2342
  %2523 = vst.msk [vmem:[%s11 + $0xd0] sm:$0xff] %vm158, %v2347
  %2524 = vst.msk [vmem:[%s11 + $0xd8] sm:$0xff] %vm158, %v2350
  %2525 = vst.msk [vmem:[%s11 + $0xe0] sm:$0xff] %vm158, %v2355
  %2526 = vst.msk [vmem:[%s11 + $0xe8] sm:$0xff] %vm158, %v2358
  %2527 = vst.msk [vmem:[%s11 + $0xf0] sm:$0xff] %vm158, %v2363
  %2528 = vst.msk [vmem:[%s11 + $0xf8] sm:$0xff] %vm158, %v2366
  %2529 = vst.msk [vmem:[%s11 + $0x100] sm:$0xff] %vm158, %v2371
  %2530 = vst.msk [vmem:[%s11 + $0x108] sm:$0xff] %vm158, %v2374
  %2531 = vst.msk [vmem:[%s11 + $0x110] sm:$0xff] %vm158, %v2379
  %2532 = vst.msk [vmem:[%s11 + $0x118] sm:$0xff] %vm158, %v2382
  %2533 = vst.msk [vmem:[%s11 + $0x120] sm:$0xff] %vm158, %v2387
  %2534 = vst.msk [vmem:[%s11 + $0x128] sm:$0xff] %vm158, %v2390
  %2535 = vst.msk [vmem:[%s11 + $0x130] sm:$0xff] %vm158, %v2395
  %2536 = vst.msk [vmem:[%s11 + $0x138] sm:$0xff] %vm158, %v2398
  %2537 = vst.msk [vmem:[%s11 + $0x140] sm:$0xff] %vm158, %v2403
  %2538 = vst.msk [vmem:[%s11 + $0x148] sm:$0xff] %vm158, %v2406
  %2539 = vst.msk [vmem:[%s11 + $0x150] sm:$0xff] %vm158, %v2411
  %2540 = vst.msk [vmem:[%s11 + $0x158] sm:$0xff] %vm158, %v2414
  %2541 = vst.msk [vmem:[%s11 + $0x160] sm:$0xff] %vm158, %v2419
  %2542 = vst.msk [vmem:[%s11 + $0x168] sm:$0xff] %vm158, %v2422
  %2543 = vst.msk [vmem:[%s11 + $0x170] sm:$0xff] %vm158, %v2427
  %2544 = vst.msk [vmem:[%s11 + $0x178] sm:$0xff] %vm158, %v2430
  %2545 = vst.msk [vmem:[%s11 + $0x180] sm:$0xff] %vm158, %v2435
  %2546 = vst.msk [vmem:[%s11 + $0x188] sm:$0xff] %vm158, %v2438
  %2547 = vst.msk [vmem:[%s11 + $0x190] sm:$0xff] %vm158, %v2443
  %2548 = vst.msk [vmem:[%s11 + $0x198] sm:$0xff] %vm158, %v2446
  %2549 = vst.msk [vmem:[%s11 + $0x1a0] sm:$0xff] %vm158, %v2451
  %2550 = vst.msk [vmem:[%s11 + $0x1a8] sm:$0xff] %vm158, %v2454
  %2551 = vst.msk [vmem:[%s11 + $0x1b0] sm:$0xff] %vm158, %v2459
  %2552 = vst.msk [vmem:[%s11 + $0x1b8] sm:$0xff] %vm158, %v2462
  %2553 = vst.msk [vmem:[%s11 + $0x1c0] sm:$0xff] %vm158, %v2467
  %2554 = vst.msk [vmem:[%s11 + $0x1c8] sm:$0xff] %vm158, %v2470
  %2555 = vst.msk [vmem:[%s11 + $0x1d0] sm:$0xff] %vm158, %v2475
  %2556 = vst.msk [vmem:[%s11 + $0x1d8] sm:$0xff] %vm158, %v2478
  %2557 = vst.msk [vmem:[%s11 + $0x1e0] sm:$0xff] %vm158, %v2483
  %2558 = vst.msk [vmem:[%s11 + $0x1e8] sm:$0xff] %vm158, %v2486
  %2559 = vst.msk [vmem:[%s11 + $0x1f0] sm:$0xff] %vm158, %v2491
  %2560 = vst.msk [vmem:[%s11 + $0x1f8] sm:$0xff] %vm158, %v2494
  // Predicated region
  $region46: #{tpu_custom_call.1} parent=0 // pred_check
    _
  $region47: #{tpu_custom_call.1} parent=0 // pred_check_branch
    %2562 = sbr.rel (0) target = $region49
  $region48: #{tpu_custom_call.1} parent=0 // pred_region
    _
  $region49: #{tpu_custom_call.1} parent=0 // pred_fallthru
    _
  // Predicated region
  $region50: #{tpu_custom_call.1} parent=0 // pred_check
    _
  $region51: #{tpu_custom_call.1} parent=0 // pred_check_branch
    %2564 = sbr.rel (0) target = $region53
  $region52: #{tpu_custom_call.1} parent=0 // pred_region
    _
  $region53: #{tpu_custom_call.1} parent=0 // pred_fallthru
    _

</llo_original>
